<compile_context>
chip_gen: v7x
topology: tpu7x:2x2x1
jax: 0.10.0
libtpu: 0.0.40
codegen_flags: <defaults>
</compile_context>

<pallas_src>
import jax
import jax.numpy as jnp
from jax.experimental import pallas as pl
from jax.experimental.pallas import tpu as pltpu


# --------------------------------------------------------------------------
# Fused kernel: 2-layer LSTM recurrence + peephole epilogue.
#   x_ref     : (T, B, D)   time-major input sequence (bf16, cast in wrapper)
#   wih1_ref  : (D, 4H)     layer-1 input->gates weights (bf16, pre-transposed)
#   whh1_ref  : (H, 4H)     layer-1 hidden->gates weights (bf16)
#   b1_ref    : (1, 4H)     layer-1 combined bias (f32)
#   wih2_ref  : (H, 4H)     layer-2 input->gates weights (bf16)
#   whh2_ref  : (H, 4H)     layer-2 hidden->gates weights (bf16)
#   b2_ref    : (1, 4H)     layer-2 combined bias (f32)
#   wf/wi/wo  : (1, H)      peephole parameters (f32)
#   res_ref   : (B, H)      output = last_hidden[:, -1, :]
# PyTorch gate order: i, f, g, o.
# --------------------------------------------------------------------------
def fused_peephole_lstm_kernel(x_ref, wih1_ref, whh1_ref, b1_ref,
                               wih2_ref, whh2_ref, b2_ref,
                               wf_ref, wi_ref, wo_ref, res_ref):
    T, B, D = x_ref.shape
    H = res_ref.shape[1]

    # ---- Layer-1 input projection for ALL time steps: one big MXU matmul,
    #      with b1 folded in (no per-step bias add on the critical path). ----
    x_all = x_ref[...].reshape(T * B, D)                       # bf16 already
    xg = (jnp.dot(x_all, wih1_ref[...], preferred_element_type=jnp.float32)
          + b1_ref[...]).reshape(T, B, 4 * H)                  # live value

    # Loop-invariant weights / biases (hoisted out of the recurrence).
    whh1 = whh1_ref[...]   # (H, 4H)  bf16
    wih2 = wih2_ref[...]   # (H, 4H)  bf16
    whh2 = whh2_ref[...]   # (H, 4H)  bf16
    b2 = b2_ref[...]       # (1, 4H)  f32

    def cell(gates, c):
        # gates: (B, 4H) f32 pre-activations, PyTorch order i,f,g,o.
        # Note: H=32 gate slices sit at 32-lane offsets -> some XLU rotates;
        # acceptable at this size (H multiple of 128 would avoid them).
        i = jax.nn.sigmoid(gates[:, 0 * H:1 * H])
        f = jax.nn.sigmoid(gates[:, 1 * H:2 * H])
        g = jnp.tanh(gates[:, 2 * H:3 * H])
        o = jax.nn.sigmoid(gates[:, 3 * H:4 * H])
        c_new = f * c + i * g
        h_new = o * jnp.tanh(c_new)
        return h_new, c_new

    h1 = jnp.zeros((B, H), jnp.float32)
    c1 = jnp.zeros((B, H), jnp.float32)
    h2 = jnp.zeros((B, H), jnp.float32)
    c2 = jnp.zeros((B, H), jnp.float32)

    # Fully unrolled static loop (T is small) -> static slices of xg, and the
    # LLO scheduler can interleave steps freely.
    # TODO(synk): for large T, switch to lax.fori_loop(unroll=2..4) with a
    # VMEM-scratch xg and a time-tiled grid.
    for t in range(T):
        # Layer-2's recurrent matmul depends only on step t-1 state: issue it
        # FIRST so it overlaps layer-1's matmul and gate math.
        rec2 = jnp.dot(h2.astype(jnp.bfloat16), whh2,
                       preferred_element_type=jnp.float32)
        # Layer 1: precomputed (bias-folded) input gates + ONE recurrent matmul.
        g1 = xg[t] + jnp.dot(h1.astype(jnp.bfloat16), whh1,
                             preferred_element_type=jnp.float32)
        h1, c1 = cell(g1, c1)
        # Layer 2: input matmul on the fresh h1, plus the pre-issued rec2.
        g2 = (jnp.dot(h1.astype(jnp.bfloat16), wih2,
                      preferred_element_type=jnp.float32)
              + rec2 + b2)
        h2, c2 = cell(g2, c2)

    # ---- Peephole epilogue, computed only for the returned [:, -1, :] slice.
    # PyTorch broadcast: out (B,T,H) + (B,H) treats c_n[-1]'s batch axis as
    # time, so at t = T-1 every batch row uses c_n[-1][T-1, :].
    c_last = c2[B - 1:B, :]                    # (1, H)
    tanh_c = jnp.tanh(c_last)
    fg = jax.nn.sigmoid(h2 + wf_ref[...] * c_last)
    ig = jax.nn.sigmoid(h2 + wi_ref[...] * c_last)
    og = jax.nn.sigmoid(h2 + wo_ref[...] * c_last)
    cell_state = ig * tanh_c + fg * c_last
    res_ref[...] = og * jnp.tanh(cell_state)


# --------------------------------------------------------------------------
# Wrapper: one pallas_call for the whole forward.
# --------------------------------------------------------------------------
def peephole_lstm_forward(x, p):
    """x: (B, T, D) batch-first, like the PyTorch module."""
    B, T, _ = x.shape
    assert T == B, "PeepholeLSTM's broadcast requires seq_len == batch_size"
    H = p["wf"].shape[-1]

    # Transpose to time-major AND cast to bf16 here (halves the x DMA and
    # removes the in-kernel cast pass).
    x_tm = jnp.transpose(x, (1, 0, 2)).astype(jnp.bfloat16)  # (T, B, D) bf16
    vmem = lambda: pl.BlockSpec(memory_space=pltpu.MemorySpace.VMEM)
    return pl.pallas_call(
        fused_peephole_lstm_kernel,
        out_shape=jax.ShapeDtypeStruct((B, H), jnp.float32),
        in_specs=[vmem() for _ in range(10)],
        out_specs=vmem(),
    )(x_tm, p["w_ih1"], p["w_hh1"], p["b1"],
      p["w_ih2"], p["w_hh2"], p["b2"], p["wf"], p["wi"], p["wo"])


# --------------------------------------------------------------------------
# Parameter init (PyTorch-shaped raw f32 params) and kernel packing.
# --------------------------------------------------------------------------
def init_raw_params(key, input_dim, hidden_dim):
    k = 1.0 / float(hidden_dim) ** 0.5
    keys = jax.random.split(key, 11)
    u = lambda kk, shape: jax.random.uniform(kk, shape, minval=-k, maxval=k,
                                             dtype=jnp.float32)
    return dict(
        w_ih1=u(keys[0], (4 * hidden_dim, input_dim)),
        w_hh1=u(keys[1], (4 * hidden_dim, hidden_dim)),
        b_ih1=u(keys[2], (4 * hidden_dim,)),
        b_hh1=u(keys[3], (4 * hidden_dim,)),
        w_ih2=u(keys[4], (4 * hidden_dim, hidden_dim)),
        w_hh2=u(keys[5], (4 * hidden_dim, hidden_dim)),
        b_ih2=u(keys[6], (4 * hidden_dim,)),
        b_hh2=u(keys[7], (4 * hidden_dim,)),
        wf=jax.random.normal(keys[8], (hidden_dim,), jnp.float32),
        wi=jax.random.normal(keys[9], (hidden_dim,), jnp.float32),
        wo=jax.random.normal(keys[10], (hidden_dim,), jnp.float32),
    )


def pack_params(raw):
    """Pre-transpose / cast weights for the kernel (bf16 MXU operands,
    f32 biases and peephole params).  Layer-2 weights are kept SPLIT so the
    kernel can issue h2@w_hh2 early and avoid the per-step lane concat."""
    return dict(
        w_ih1=raw["w_ih1"].T.astype(jnp.bfloat16),                      # (D, 4H)
        w_hh1=raw["w_hh1"].T.astype(jnp.bfloat16),                      # (H, 4H)
        b1=(raw["b_ih1"] + raw["b_hh1"]).reshape(1, -1),                # (1, 4H)
        w_ih2=raw["w_ih2"].T.astype(jnp.bfloat16),                      # (H, 4H)
        w_hh2=raw["w_hh2"].T.astype(jnp.bfloat16),                      # (H, 4H)
        b2=(raw["b_ih2"] + raw["b_hh2"]).reshape(1, -1),                # (1, 4H)
        wf=raw["wf"].reshape(1, -1),
        wi=raw["wi"].reshape(1, -1),
        wo=raw["wo"].reshape(1, -1),
    )


# --------------------------------------------------------------------------
# Pure-JAX reference mirroring the PyTorch module (f32), for a sanity check.
# --------------------------------------------------------------------------
def reference_forward(x, raw):
    H = raw["w_hh1"].shape[1]

    def lstm_layer(seq, w_ih, w_hh, b_ih, b_hh):
        Bb, Tt, _ = seq.shape
        h = jnp.zeros((Bb, H), jnp.float32)
        c = jnp.zeros((Bb, H), jnp.float32)
        outs = []
        for t in range(Tt):
            gates = seq[:, t, :] @ w_ih.T + h @ w_hh.T + b_ih + b_hh
            i = jax.nn.sigmoid(gates[:, 0 * H:1 * H])
            f = jax.nn.sigmoid(gates[:, 1 * H:2 * H])
            g = jnp.tanh(gates[:, 2 * H:3 * H])
            o = jax.nn.sigmoid(gates[:, 3 * H:4 * H])
            c = f * c + i * g
            h = o * jnp.tanh(c)
            outs.append(h)
        return jnp.stack(outs, axis=1), h, c

    out1, _, _ = lstm_layer(x, raw["w_ih1"], raw["w_hh1"], raw["b_ih1"], raw["b_hh1"])
    out2, _, c2 = lstm_layer(out1, raw["w_ih2"], raw["w_hh2"], raw["b_ih2"], raw["b_hh2"])
    # Same (quirky) broadcast as the PyTorch code: (B,T,H) + (B,H) needs T==B.
    fg = jax.nn.sigmoid(out2 + raw["wf"] * c2)
    ig = jax.nn.sigmoid(out2 + raw["wi"] * c2)
    og = jax.nn.sigmoid(out2 + raw["wo"] * c2)
    cell_state = ig * jnp.tanh(c2) + fg * c2
    last_hidden = og * jnp.tanh(cell_state)
    return last_hidden[:, -1, :]


if __name__ == "__main__":
    # Module's broadcast requires seq_len == batch_size.
    B = 8      # batch_size == seq_len
    T = 8
    D = 16     # input_dim
    H = 32     # hidden_dim

    key = jax.random.PRNGKey(0)
    kx, kp = jax.random.split(key)
    x = jax.random.normal(kx, (B, T, D), dtype=jnp.float32)
    raw = init_raw_params(kp, D, H)
    params = pack_params(raw)

    result = peephole_lstm_forward(x, params)
    result = jax.block_until_ready(result)
    assert result.shape == (B, H) and result.dtype == jnp.float32

    # Numerical sanity check against the f32 reference (bf16 MXU operands ->
    # small, bounded error through the saturating gate nonlinearities).
    ref = reference_forward(x, raw)
    max_err = float(jnp.max(jnp.abs(result - ref)))
    assert max_err < 5e-2, f"max abs error vs reference: {max_err}"

    print("KERNEL_OK")
</pallas_src>

<mosaic_0001>
module attributes {stable_mosaic.version = 11 : i64} {
  func.func @fused_peephole_lstm_kernel(%arg0: memref<8x8x16xbf16, #tpu.memory_space<vmem>>, %arg1: memref<16x128xbf16, #tpu.memory_space<vmem>>, %arg2: memref<32x128xbf16, #tpu.memory_space<vmem>>, %arg3: memref<1x128xf32, #tpu.memory_space<vmem>>, %arg4: memref<32x128xbf16, #tpu.memory_space<vmem>>, %arg5: memref<32x128xbf16, #tpu.memory_space<vmem>>, %arg6: memref<1x128xf32, #tpu.memory_space<vmem>>, %arg7: memref<1x32xf32, #tpu.memory_space<vmem>>, %arg8: memref<1x32xf32, #tpu.memory_space<vmem>>, %arg9: memref<1x32xf32, #tpu.memory_space<vmem>>, %arg10: memref<8x32xf32, #tpu.memory_space<vmem>>) attributes {dimension_semantics = [], scalar_prefetch = 0 : i64, scratch_operands = 0 : i64, tpu.core_type = #tpu.core_type<tc>} {
    %c0 = arith.constant 0 : index
    %c0_0 = arith.constant 0 : index
    %c0_1 = arith.constant 0 : index
    %0 = vector.load %arg0[%c0, %c0_0, %c0_1] : memref<8x8x16xbf16, #tpu.memory_space<vmem>>, vector<8x8x16xbf16>
    %1 = vector.shape_cast %0 : vector<8x8x16xbf16> to vector<64x16xbf16>
    %c0_2 = arith.constant 0 : index
    %c0_3 = arith.constant 0 : index
    %2 = vector.load %arg1[%c0_2, %c0_3] : memref<16x128xbf16, #tpu.memory_space<vmem>>, vector<16x128xbf16>
    %cst = arith.constant dense<0.000000e+00> : vector<64x128xf32>
    %3 = tpu.matmul %1, %2, %cst {dimension_numbers = #tpu.dot_dimension_numbers<[1], [0], [0], [1], [0, 0, 1, 1], [], []>} : vector<64x16xbf16>, vector<16x128xbf16>, vector<64x128xf32> -> vector<64x128xf32>
    %c0_4 = arith.constant 0 : index
    %c0_5 = arith.constant 0 : index
    %4 = vector.load %arg3[%c0_4, %c0_5] : memref<1x128xf32, #tpu.memory_space<vmem>>, vector<1x128xf32>
    %5 = vector.broadcast %4 : vector<1x128xf32> to vector<64x128xf32>
    %6 = arith.addf %3, %5 : vector<64x128xf32>
    %7 = vector.shape_cast %6 : vector<64x128xf32> to vector<8x8x128xf32>
    %c0_6 = arith.constant 0 : index
    %c0_7 = arith.constant 0 : index
    %8 = vector.load %arg2[%c0_6, %c0_7] : memref<32x128xbf16, #tpu.memory_space<vmem>>, vector<32x128xbf16>
    %c0_8 = arith.constant 0 : index
    %c0_9 = arith.constant 0 : index
    %9 = vector.load %arg4[%c0_8, %c0_9] : memref<32x128xbf16, #tpu.memory_space<vmem>>, vector<32x128xbf16>
    %c0_10 = arith.constant 0 : index
    %c0_11 = arith.constant 0 : index
    %10 = vector.load %arg5[%c0_10, %c0_11] : memref<32x128xbf16, #tpu.memory_space<vmem>>, vector<32x128xbf16>
    %c0_12 = arith.constant 0 : index
    %c0_13 = arith.constant 0 : index
    %11 = vector.load %arg6[%c0_12, %c0_13] : memref<1x128xf32, #tpu.memory_space<vmem>>, vector<1x128xf32>
    %cst_14 = arith.constant 0.000000e+00 : f32
    %12 = vector.broadcast %cst_14 : f32 to vector<8x32xf32>
    %cst_15 = arith.constant 0.000000e+00 : f32
    %13 = vector.broadcast %cst_15 : f32 to vector<8x32xf32>
    %cst_16 = arith.constant 0.000000e+00 : f32
    %14 = vector.broadcast %cst_16 : f32 to vector<8x32xf32>
    %cst_17 = arith.constant 0.000000e+00 : f32
    %15 = vector.broadcast %cst_17 : f32 to vector<8x32xf32>
    %16 = arith.truncf %14 : vector<8x32xf32> to vector<8x32xbf16>
    %cst_18 = arith.constant dense<0.000000e+00> : vector<8x128xf32>
    %17 = tpu.matmul %16, %10, %cst_18 {dimension_numbers = #tpu.dot_dimension_numbers<[1], [0], [0], [1], [0, 0, 1, 1], [], []>} : vector<8x32xbf16>, vector<32x128xbf16>, vector<8x128xf32> -> vector<8x128xf32>
    %18 = vector.extract_strided_slice %7 {offsets = [0, 0, 0], sizes = [1, 8, 128], strides = [1, 1, 1]} : vector<8x8x128xf32> to vector<1x8x128xf32>
    %19 = vector.shape_cast %18 : vector<1x8x128xf32> to vector<8x128xf32>
    %20 = arith.truncf %12 : vector<8x32xf32> to vector<8x32xbf16>
    %cst_19 = arith.constant dense<0.000000e+00> : vector<8x128xf32>
    %21 = tpu.matmul %20, %8, %cst_19 {dimension_numbers = #tpu.dot_dimension_numbers<[1], [0], [0], [1], [0, 0, 1, 1], [], []>} : vector<8x32xbf16>, vector<32x128xbf16>, vector<8x128xf32> -> vector<8x128xf32>
    %22 = arith.addf %19, %21 : vector<8x128xf32>
    %23 = vector.extract_strided_slice %22 {offsets = [0, 0], sizes = [8, 32], strides = [1, 1]} : vector<8x128xf32> to vector<8x32xf32>
    %24 = arith.negf %23 : vector<8x32xf32>
    %25 = math.exp %24 : vector<8x32xf32>
    %cst_20 = arith.constant 1.000000e+00 : f32
    %26 = vector.broadcast %cst_20 : f32 to vector<8x32xf32>
    %27 = arith.addf %26, %25 : vector<8x32xf32>
    %28 = arith.divf %26, %27 : vector<8x32xf32>
    %29 = vector.extract_strided_slice %22 {offsets = [0, 32], sizes = [8, 32], strides = [1, 1]} : vector<8x128xf32> to vector<8x32xf32>
    %30 = arith.negf %29 : vector<8x32xf32>
    %31 = math.exp %30 : vector<8x32xf32>
    %cst_21 = arith.constant 1.000000e+00 : f32
    %32 = vector.broadcast %cst_21 : f32 to vector<8x32xf32>
    %33 = arith.addf %32, %31 : vector<8x32xf32>
    %34 = arith.divf %32, %33 : vector<8x32xf32>
    %35 = vector.extract_strided_slice %22 {offsets = [0, 64], sizes = [8, 32], strides = [1, 1]} : vector<8x128xf32> to vector<8x32xf32>
    %36 = math.tanh %35 : vector<8x32xf32>
    %37 = vector.extract_strided_slice %22 {offsets = [0, 96], sizes = [8, 32], strides = [1, 1]} : vector<8x128xf32> to vector<8x32xf32>
    %38 = arith.negf %37 : vector<8x32xf32>
    %39 = math.exp %38 : vector<8x32xf32>
    %cst_22 = arith.constant 1.000000e+00 : f32
    %40 = vector.broadcast %cst_22 : f32 to vector<8x32xf32>
    %41 = arith.addf %40, %39 : vector<8x32xf32>
    %42 = arith.divf %40, %41 : vector<8x32xf32>
    %43 = arith.mulf %34, %13 : vector<8x32xf32>
    %44 = arith.mulf %28, %36 : vector<8x32xf32>
    %45 = arith.addf %43, %44 : vector<8x32xf32>
    %46 = math.tanh %45 : vector<8x32xf32>
    %47 = arith.mulf %42, %46 : vector<8x32xf32>
    %48 = arith.truncf %47 : vector<8x32xf32> to vector<8x32xbf16>
    %cst_23 = arith.constant dense<0.000000e+00> : vector<8x128xf32>
    %49 = tpu.matmul %48, %9, %cst_23 {dimension_numbers = #tpu.dot_dimension_numbers<[1], [0], [0], [1], [0, 0, 1, 1], [], []>} : vector<8x32xbf16>, vector<32x128xbf16>, vector<8x128xf32> -> vector<8x128xf32>
    %50 = arith.addf %49, %17 : vector<8x128xf32>
    %51 = vector.broadcast %11 : vector<1x128xf32> to vector<8x128xf32>
    %52 = arith.addf %50, %51 : vector<8x128xf32>
    %53 = vector.extract_strided_slice %52 {offsets = [0, 0], sizes = [8, 32], strides = [1, 1]} : vector<8x128xf32> to vector<8x32xf32>
    %54 = arith.negf %53 : vector<8x32xf32>
    %55 = math.exp %54 : vector<8x32xf32>
    %cst_24 = arith.constant 1.000000e+00 : f32
    %56 = vector.broadcast %cst_24 : f32 to vector<8x32xf32>
    %57 = arith.addf %56, %55 : vector<8x32xf32>
    %58 = arith.divf %56, %57 : vector<8x32xf32>
    %59 = vector.extract_strided_slice %52 {offsets = [0, 32], sizes = [8, 32], strides = [1, 1]} : vector<8x128xf32> to vector<8x32xf32>
    %60 = arith.negf %59 : vector<8x32xf32>
    %61 = math.exp %60 : vector<8x32xf32>
    %cst_25 = arith.constant 1.000000e+00 : f32
    %62 = vector.broadcast %cst_25 : f32 to vector<8x32xf32>
    %63 = arith.addf %62, %61 : vector<8x32xf32>
    %64 = arith.divf %62, %63 : vector<8x32xf32>
    %65 = vector.extract_strided_slice %52 {offsets = [0, 64], sizes = [8, 32], strides = [1, 1]} : vector<8x128xf32> to vector<8x32xf32>
    %66 = math.tanh %65 : vector<8x32xf32>
    %67 = vector.extract_strided_slice %52 {offsets = [0, 96], sizes = [8, 32], strides = [1, 1]} : vector<8x128xf32> to vector<8x32xf32>
    %68 = arith.negf %67 : vector<8x32xf32>
    %69 = math.exp %68 : vector<8x32xf32>
    %cst_26 = arith.constant 1.000000e+00 : f32
    %70 = vector.broadcast %cst_26 : f32 to vector<8x32xf32>
    %71 = arith.addf %70, %69 : vector<8x32xf32>
    %72 = arith.divf %70, %71 : vector<8x32xf32>
    %73 = arith.mulf %64, %15 : vector<8x32xf32>
    %74 = arith.mulf %58, %66 : vector<8x32xf32>
    %75 = arith.addf %73, %74 : vector<8x32xf32>
    %76 = math.tanh %75 : vector<8x32xf32>
    %77 = arith.mulf %72, %76 : vector<8x32xf32>
    %78 = arith.truncf %77 : vector<8x32xf32> to vector<8x32xbf16>
    %cst_27 = arith.constant dense<0.000000e+00> : vector<8x128xf32>
    %79 = tpu.matmul %78, %10, %cst_27 {dimension_numbers = #tpu.dot_dimension_numbers<[1], [0], [0], [1], [0, 0, 1, 1], [], []>} : vector<8x32xbf16>, vector<32x128xbf16>, vector<8x128xf32> -> vector<8x128xf32>
    %80 = vector.extract_strided_slice %7 {offsets = [1, 0, 0], sizes = [1, 8, 128], strides = [1, 1, 1]} : vector<8x8x128xf32> to vector<1x8x128xf32>
    %81 = vector.shape_cast %80 : vector<1x8x128xf32> to vector<8x128xf32>
    %82 = arith.truncf %47 : vector<8x32xf32> to vector<8x32xbf16>
    %cst_28 = arith.constant dense<0.000000e+00> : vector<8x128xf32>
    %83 = tpu.matmul %82, %8, %cst_28 {dimension_numbers = #tpu.dot_dimension_numbers<[1], [0], [0], [1], [0, 0, 1, 1], [], []>} : vector<8x32xbf16>, vector<32x128xbf16>, vector<8x128xf32> -> vector<8x128xf32>
    %84 = arith.addf %81, %83 : vector<8x128xf32>
    %85 = vector.extract_strided_slice %84 {offsets = [0, 0], sizes = [8, 32], strides = [1, 1]} : vector<8x128xf32> to vector<8x32xf32>
    %86 = arith.negf %85 : vector<8x32xf32>
    %87 = math.exp %86 : vector<8x32xf32>
    %cst_29 = arith.constant 1.000000e+00 : f32
    %88 = vector.broadcast %cst_29 : f32 to vector<8x32xf32>
    %89 = arith.addf %88, %87 : vector<8x32xf32>
    %90 = arith.divf %88, %89 : vector<8x32xf32>
    %91 = vector.extract_strided_slice %84 {offsets = [0, 32], sizes = [8, 32], strides = [1, 1]} : vector<8x128xf32> to vector<8x32xf32>
    %92 = arith.negf %91 : vector<8x32xf32>
    %93 = math.exp %92 : vector<8x32xf32>
    %cst_30 = arith.constant 1.000000e+00 : f32
    %94 = vector.broadcast %cst_30 : f32 to vector<8x32xf32>
    %95 = arith.addf %94, %93 : vector<8x32xf32>
    %96 = arith.divf %94, %95 : vector<8x32xf32>
    %97 = vector.extract_strided_slice %84 {offsets = [0, 64], sizes = [8, 32], strides = [1, 1]} : vector<8x128xf32> to vector<8x32xf32>
    %98 = math.tanh %97 : vector<8x32xf32>
    %99 = vector.extract_strided_slice %84 {offsets = [0, 96], sizes = [8, 32], strides = [1, 1]} : vector<8x128xf32> to vector<8x32xf32>
    %100 = arith.negf %99 : vector<8x32xf32>
    %101 = math.exp %100 : vector<8x32xf32>
    %cst_31 = arith.constant 1.000000e+00 : f32
    %102 = vector.broadcast %cst_31 : f32 to vector<8x32xf32>
    %103 = arith.addf %102, %101 : vector<8x32xf32>
    %104 = arith.divf %102, %103 : vector<8x32xf32>
    %105 = arith.mulf %96, %45 : vector<8x32xf32>
    %106 = arith.mulf %90, %98 : vector<8x32xf32>
    %107 = arith.addf %105, %106 : vector<8x32xf32>
    %108 = math.tanh %107 : vector<8x32xf32>
    %109 = arith.mulf %104, %108 : vector<8x32xf32>
    %110 = arith.truncf %109 : vector<8x32xf32> to vector<8x32xbf16>
    %cst_32 = arith.constant dense<0.000000e+00> : vector<8x128xf32>
    %111 = tpu.matmul %110, %9, %cst_32 {dimension_numbers = #tpu.dot_dimension_numbers<[1], [0], [0], [1], [0, 0, 1, 1], [], []>} : vector<8x32xbf16>, vector<32x128xbf16>, vector<8x128xf32> -> vector<8x128xf32>
    %112 = arith.addf %111, %79 : vector<8x128xf32>
    %113 = vector.broadcast %11 : vector<1x128xf32> to vector<8x128xf32>
    %114 = arith.addf %112, %113 : vector<8x128xf32>
    %115 = vector.extract_strided_slice %114 {offsets = [0, 0], sizes = [8, 32], strides = [1, 1]} : vector<8x128xf32> to vector<8x32xf32>
    %116 = arith.negf %115 : vector<8x32xf32>
    %117 = math.exp %116 : vector<8x32xf32>
    %cst_33 = arith.constant 1.000000e+00 : f32
    %118 = vector.broadcast %cst_33 : f32 to vector<8x32xf32>
    %119 = arith.addf %118, %117 : vector<8x32xf32>
    %120 = arith.divf %118, %119 : vector<8x32xf32>
    %121 = vector.extract_strided_slice %114 {offsets = [0, 32], sizes = [8, 32], strides = [1, 1]} : vector<8x128xf32> to vector<8x32xf32>
    %122 = arith.negf %121 : vector<8x32xf32>
    %123 = math.exp %122 : vector<8x32xf32>
    %cst_34 = arith.constant 1.000000e+00 : f32
    %124 = vector.broadcast %cst_34 : f32 to vector<8x32xf32>
    %125 = arith.addf %124, %123 : vector<8x32xf32>
    %126 = arith.divf %124, %125 : vector<8x32xf32>
    %127 = vector.extract_strided_slice %114 {offsets = [0, 64], sizes = [8, 32], strides = [1, 1]} : vector<8x128xf32> to vector<8x32xf32>
    %128 = math.tanh %127 : vector<8x32xf32>
    %129 = vector.extract_strided_slice %114 {offsets = [0, 96], sizes = [8, 32], strides = [1, 1]} : vector<8x128xf32> to vector<8x32xf32>
    %130 = arith.negf %129 : vector<8x32xf32>
    %131 = math.exp %130 : vector<8x32xf32>
    %cst_35 = arith.constant 1.000000e+00 : f32
    %132 = vector.broadcast %cst_35 : f32 to vector<8x32xf32>
    %133 = arith.addf %132, %131 : vector<8x32xf32>
    %134 = arith.divf %132, %133 : vector<8x32xf32>
    %135 = arith.mulf %126, %75 : vector<8x32xf32>
    %136 = arith.mulf %120, %128 : vector<8x32xf32>
    %137 = arith.addf %135, %136 : vector<8x32xf32>
    %138 = math.tanh %137 : vector<8x32xf32>
    %139 = arith.mulf %134, %138 : vector<8x32xf32>
    %140 = arith.truncf %139 : vector<8x32xf32> to vector<8x32xbf16>
    %cst_36 = arith.constant dense<0.000000e+00> : vector<8x128xf32>
    %141 = tpu.matmul %140, %10, %cst_36 {dimension_numbers = #tpu.dot_dimension_numbers<[1], [0], [0], [1], [0, 0, 1, 1], [], []>} : vector<8x32xbf16>, vector<32x128xbf16>, vector<8x128xf32> -> vector<8x128xf32>
    %142 = vector.extract_strided_slice %7 {offsets = [2, 0, 0], sizes = [1, 8, 128], strides = [1, 1, 1]} : vector<8x8x128xf32> to vector<1x8x128xf32>
    %143 = vector.shape_cast %142 : vector<1x8x128xf32> to vector<8x128xf32>
    %144 = arith.truncf %109 : vector<8x32xf32> to vector<8x32xbf16>
    %cst_37 = arith.constant dense<0.000000e+00> : vector<8x128xf32>
    %145 = tpu.matmul %144, %8, %cst_37 {dimension_numbers = #tpu.dot_dimension_numbers<[1], [0], [0], [1], [0, 0, 1, 1], [], []>} : vector<8x32xbf16>, vector<32x128xbf16>, vector<8x128xf32> -> vector<8x128xf32>
    %146 = arith.addf %143, %145 : vector<8x128xf32>
    %147 = vector.extract_strided_slice %146 {offsets = [0, 0], sizes = [8, 32], strides = [1, 1]} : vector<8x128xf32> to vector<8x32xf32>
    %148 = arith.negf %147 : vector<8x32xf32>
    %149 = math.exp %148 : vector<8x32xf32>
    %cst_38 = arith.constant 1.000000e+00 : f32
    %150 = vector.broadcast %cst_38 : f32 to vector<8x32xf32>
    %151 = arith.addf %150, %149 : vector<8x32xf32>
    %152 = arith.divf %150, %151 : vector<8x32xf32>
    %153 = vector.extract_strided_slice %146 {offsets = [0, 32], sizes = [8, 32], strides = [1, 1]} : vector<8x128xf32> to vector<8x32xf32>
    %154 = arith.negf %153 : vector<8x32xf32>
    %155 = math.exp %154 : vector<8x32xf32>
    %cst_39 = arith.constant 1.000000e+00 : f32
    %156 = vector.broadcast %cst_39 : f32 to vector<8x32xf32>
    %157 = arith.addf %156, %155 : vector<8x32xf32>
    %158 = arith.divf %156, %157 : vector<8x32xf32>
    %159 = vector.extract_strided_slice %146 {offsets = [0, 64], sizes = [8, 32], strides = [1, 1]} : vector<8x128xf32> to vector<8x32xf32>
    %160 = math.tanh %159 : vector<8x32xf32>
    %161 = vector.extract_strided_slice %146 {offsets = [0, 96], sizes = [8, 32], strides = [1, 1]} : vector<8x128xf32> to vector<8x32xf32>
    %162 = arith.negf %161 : vector<8x32xf32>
    %163 = math.exp %162 : vector<8x32xf32>
    %cst_40 = arith.constant 1.000000e+00 : f32
    %164 = vector.broadcast %cst_40 : f32 to vector<8x32xf32>
    %165 = arith.addf %164, %163 : vector<8x32xf32>
    %166 = arith.divf %164, %165 : vector<8x32xf32>
    %167 = arith.mulf %158, %107 : vector<8x32xf32>
    %168 = arith.mulf %152, %160 : vector<8x32xf32>
    %169 = arith.addf %167, %168 : vector<8x32xf32>
    %170 = math.tanh %169 : vector<8x32xf32>
    %171 = arith.mulf %166, %170 : vector<8x32xf32>
    %172 = arith.truncf %171 : vector<8x32xf32> to vector<8x32xbf16>
    %cst_41 = arith.constant dense<0.000000e+00> : vector<8x128xf32>
    %173 = tpu.matmul %172, %9, %cst_41 {dimension_numbers = #tpu.dot_dimension_numbers<[1], [0], [0], [1], [0, 0, 1, 1], [], []>} : vector<8x32xbf16>, vector<32x128xbf16>, vector<8x128xf32> -> vector<8x128xf32>
    %174 = arith.addf %173, %141 : vector<8x128xf32>
    %175 = vector.broadcast %11 : vector<1x128xf32> to vector<8x128xf32>
    %176 = arith.addf %174, %175 : vector<8x128xf32>
    %177 = vector.extract_strided_slice %176 {offsets = [0, 0], sizes = [8, 32], strides = [1, 1]} : vector<8x128xf32> to vector<8x32xf32>
    %178 = arith.negf %177 : vector<8x32xf32>
    %179 = math.exp %178 : vector<8x32xf32>
    %cst_42 = arith.constant 1.000000e+00 : f32
    %180 = vector.broadcast %cst_42 : f32 to vector<8x32xf32>
    %181 = arith.addf %180, %179 : vector<8x32xf32>
    %182 = arith.divf %180, %181 : vector<8x32xf32>
    %183 = vector.extract_strided_slice %176 {offsets = [0, 32], sizes = [8, 32], strides = [1, 1]} : vector<8x128xf32> to vector<8x32xf32>
    %184 = arith.negf %183 : vector<8x32xf32>
    %185 = math.exp %184 : vector<8x32xf32>
    %cst_43 = arith.constant 1.000000e+00 : f32
    %186 = vector.broadcast %cst_43 : f32 to vector<8x32xf32>
    %187 = arith.addf %186, %185 : vector<8x32xf32>
    %188 = arith.divf %186, %187 : vector<8x32xf32>
    %189 = vector.extract_strided_slice %176 {offsets = [0, 64], sizes = [8, 32], strides = [1, 1]} : vector<8x128xf32> to vector<8x32xf32>
    %190 = math.tanh %189 : vector<8x32xf32>
    %191 = vector.extract_strided_slice %176 {offsets = [0, 96], sizes = [8, 32], strides = [1, 1]} : vector<8x128xf32> to vector<8x32xf32>
    %192 = arith.negf %191 : vector<8x32xf32>
    %193 = math.exp %192 : vector<8x32xf32>
    %cst_44 = arith.constant 1.000000e+00 : f32
    %194 = vector.broadcast %cst_44 : f32 to vector<8x32xf32>
    %195 = arith.addf %194, %193 : vector<8x32xf32>
    %196 = arith.divf %194, %195 : vector<8x32xf32>
    %197 = arith.mulf %188, %137 : vector<8x32xf32>
    %198 = arith.mulf %182, %190 : vector<8x32xf32>
    %199 = arith.addf %197, %198 : vector<8x32xf32>
    %200 = math.tanh %199 : vector<8x32xf32>
    %201 = arith.mulf %196, %200 : vector<8x32xf32>
    %202 = arith.truncf %201 : vector<8x32xf32> to vector<8x32xbf16>
    %cst_45 = arith.constant dense<0.000000e+00> : vector<8x128xf32>
    %203 = tpu.matmul %202, %10, %cst_45 {dimension_numbers = #tpu.dot_dimension_numbers<[1], [0], [0], [1], [0, 0, 1, 1], [], []>} : vector<8x32xbf16>, vector<32x128xbf16>, vector<8x128xf32> -> vector<8x128xf32>
    %204 = vector.extract_strided_slice %7 {offsets = [3, 0, 0], sizes = [1, 8, 128], strides = [1, 1, 1]} : vector<8x8x128xf32> to vector<1x8x128xf32>
    %205 = vector.shape_cast %204 : vector<1x8x128xf32> to vector<8x128xf32>
    %206 = arith.truncf %171 : vector<8x32xf32> to vector<8x32xbf16>
    %cst_46 = arith.constant dense<0.000000e+00> : vector<8x128xf32>
    %207 = tpu.matmul %206, %8, %cst_46 {dimension_numbers = #tpu.dot_dimension_numbers<[1], [0], [0], [1], [0, 0, 1, 1], [], []>} : vector<8x32xbf16>, vector<32x128xbf16>, vector<8x128xf32> -> vector<8x128xf32>
    %208 = arith.addf %205, %207 : vector<8x128xf32>
    %209 = vector.extract_strided_slice %208 {offsets = [0, 0], sizes = [8, 32], strides = [1, 1]} : vector<8x128xf32> to vector<8x32xf32>
    %210 = arith.negf %209 : vector<8x32xf32>
    %211 = math.exp %210 : vector<8x32xf32>
    %cst_47 = arith.constant 1.000000e+00 : f32
    %212 = vector.broadcast %cst_47 : f32 to vector<8x32xf32>
    %213 = arith.addf %212, %211 : vector<8x32xf32>
    %214 = arith.divf %212, %213 : vector<8x32xf32>
    %215 = vector.extract_strided_slice %208 {offsets = [0, 32], sizes = [8, 32], strides = [1, 1]} : vector<8x128xf32> to vector<8x32xf32>
    %216 = arith.negf %215 : vector<8x32xf32>
    %217 = math.exp %216 : vector<8x32xf32>
    %cst_48 = arith.constant 1.000000e+00 : f32
    %218 = vector.broadcast %cst_48 : f32 to vector<8x32xf32>
    %219 = arith.addf %218, %217 : vector<8x32xf32>
    %220 = arith.divf %218, %219 : vector<8x32xf32>
    %221 = vector.extract_strided_slice %208 {offsets = [0, 64], sizes = [8, 32], strides = [1, 1]} : vector<8x128xf32> to vector<8x32xf32>
    %222 = math.tanh %221 : vector<8x32xf32>
    %223 = vector.extract_strided_slice %208 {offsets = [0, 96], sizes = [8, 32], strides = [1, 1]} : vector<8x128xf32> to vector<8x32xf32>
    %224 = arith.negf %223 : vector<8x32xf32>
    %225 = math.exp %224 : vector<8x32xf32>
    %cst_49 = arith.constant 1.000000e+00 : f32
    %226 = vector.broadcast %cst_49 : f32 to vector<8x32xf32>
    %227 = arith.addf %226, %225 : vector<8x32xf32>
    %228 = arith.divf %226, %227 : vector<8x32xf32>
    %229 = arith.mulf %220, %169 : vector<8x32xf32>
    %230 = arith.mulf %214, %222 : vector<8x32xf32>
    %231 = arith.addf %229, %230 : vector<8x32xf32>
    %232 = math.tanh %231 : vector<8x32xf32>
    %233 = arith.mulf %228, %232 : vector<8x32xf32>
    %234 = arith.truncf %233 : vector<8x32xf32> to vector<8x32xbf16>
    %cst_50 = arith.constant dense<0.000000e+00> : vector<8x128xf32>
    %235 = tpu.matmul %234, %9, %cst_50 {dimension_numbers = #tpu.dot_dimension_numbers<[1], [0], [0], [1], [0, 0, 1, 1], [], []>} : vector<8x32xbf16>, vector<32x128xbf16>, vector<8x128xf32> -> vector<8x128xf32>
    %236 = arith.addf %235, %203 : vector<8x128xf32>
    %237 = vector.broadcast %11 : vector<1x128xf32> to vector<8x128xf32>
    %238 = arith.addf %236, %237 : vector<8x128xf32>
    %239 = vector.extract_strided_slice %238 {offsets = [0, 0], sizes = [8, 32], strides = [1, 1]} : vector<8x128xf32> to vector<8x32xf32>
    %240 = arith.negf %239 : vector<8x32xf32>
    %241 = math.exp %240 : vector<8x32xf32>
    %cst_51 = arith.constant 1.000000e+00 : f32
    %242 = vector.broadcast %cst_51 : f32 to vector<8x32xf32>
    %243 = arith.addf %242, %241 : vector<8x32xf32>
    %244 = arith.divf %242, %243 : vector<8x32xf32>
    %245 = vector.extract_strided_slice %238 {offsets = [0, 32], sizes = [8, 32], strides = [1, 1]} : vector<8x128xf32> to vector<8x32xf32>
    %246 = arith.negf %245 : vector<8x32xf32>
    %247 = math.exp %246 : vector<8x32xf32>
    %cst_52 = arith.constant 1.000000e+00 : f32
    %248 = vector.broadcast %cst_52 : f32 to vector<8x32xf32>
    %249 = arith.addf %248, %247 : vector<8x32xf32>
    %250 = arith.divf %248, %249 : vector<8x32xf32>
    %251 = vector.extract_strided_slice %238 {offsets = [0, 64], sizes = [8, 32], strides = [1, 1]} : vector<8x128xf32> to vector<8x32xf32>
    %252 = math.tanh %251 : vector<8x32xf32>
    %253 = vector.extract_strided_slice %238 {offsets = [0, 96], sizes = [8, 32], strides = [1, 1]} : vector<8x128xf32> to vector<8x32xf32>
    %254 = arith.negf %253 : vector<8x32xf32>
    %255 = math.exp %254 : vector<8x32xf32>
    %cst_53 = arith.constant 1.000000e+00 : f32
    %256 = vector.broadcast %cst_53 : f32 to vector<8x32xf32>
    %257 = arith.addf %256, %255 : vector<8x32xf32>
    %258 = arith.divf %256, %257 : vector<8x32xf32>
    %259 = arith.mulf %250, %199 : vector<8x32xf32>
    %260 = arith.mulf %244, %252 : vector<8x32xf32>
    %261 = arith.addf %259, %260 : vector<8x32xf32>
    %262 = math.tanh %261 : vector<8x32xf32>
    %263 = arith.mulf %258, %262 : vector<8x32xf32>
    %264 = arith.truncf %263 : vector<8x32xf32> to vector<8x32xbf16>
    %cst_54 = arith.constant dense<0.000000e+00> : vector<8x128xf32>
    %265 = tpu.matmul %264, %10, %cst_54 {dimension_numbers = #tpu.dot_dimension_numbers<[1], [0], [0], [1], [0, 0, 1, 1], [], []>} : vector<8x32xbf16>, vector<32x128xbf16>, vector<8x128xf32> -> vector<8x128xf32>
    %266 = vector.extract_strided_slice %7 {offsets = [4, 0, 0], sizes = [1, 8, 128], strides = [1, 1, 1]} : vector<8x8x128xf32> to vector<1x8x128xf32>
    %267 = vector.shape_cast %266 : vector<1x8x128xf32> to vector<8x128xf32>
    %268 = arith.truncf %233 : vector<8x32xf32> to vector<8x32xbf16>
    %cst_55 = arith.constant dense<0.000000e+00> : vector<8x128xf32>
    %269 = tpu.matmul %268, %8, %cst_55 {dimension_numbers = #tpu.dot_dimension_numbers<[1], [0], [0], [1], [0, 0, 1, 1], [], []>} : vector<8x32xbf16>, vector<32x128xbf16>, vector<8x128xf32> -> vector<8x128xf32>
    %270 = arith.addf %267, %269 : vector<8x128xf32>
    %271 = vector.extract_strided_slice %270 {offsets = [0, 0], sizes = [8, 32], strides = [1, 1]} : vector<8x128xf32> to vector<8x32xf32>
    %272 = arith.negf %271 : vector<8x32xf32>
    %273 = math.exp %272 : vector<8x32xf32>
    %cst_56 = arith.constant 1.000000e+00 : f32
    %274 = vector.broadcast %cst_56 : f32 to vector<8x32xf32>
    %275 = arith.addf %274, %273 : vector<8x32xf32>
    %276 = arith.divf %274, %275 : vector<8x32xf32>
    %277 = vector.extract_strided_slice %270 {offsets = [0, 32], sizes = [8, 32], strides = [1, 1]} : vector<8x128xf32> to vector<8x32xf32>
    %278 = arith.negf %277 : vector<8x32xf32>
    %279 = math.exp %278 : vector<8x32xf32>
    %cst_57 = arith.constant 1.000000e+00 : f32
    %280 = vector.broadcast %cst_57 : f32 to vector<8x32xf32>
    %281 = arith.addf %280, %279 : vector<8x32xf32>
    %282 = arith.divf %280, %281 : vector<8x32xf32>
    %283 = vector.extract_strided_slice %270 {offsets = [0, 64], sizes = [8, 32], strides = [1, 1]} : vector<8x128xf32> to vector<8x32xf32>
    %284 = math.tanh %283 : vector<8x32xf32>
    %285 = vector.extract_strided_slice %270 {offsets = [0, 96], sizes = [8, 32], strides = [1, 1]} : vector<8x128xf32> to vector<8x32xf32>
    %286 = arith.negf %285 : vector<8x32xf32>
    %287 = math.exp %286 : vector<8x32xf32>
    %cst_58 = arith.constant 1.000000e+00 : f32
    %288 = vector.broadcast %cst_58 : f32 to vector<8x32xf32>
    %289 = arith.addf %288, %287 : vector<8x32xf32>
    %290 = arith.divf %288, %289 : vector<8x32xf32>
    %291 = arith.mulf %282, %231 : vector<8x32xf32>
    %292 = arith.mulf %276, %284 : vector<8x32xf32>
    %293 = arith.addf %291, %292 : vector<8x32xf32>
    %294 = math.tanh %293 : vector<8x32xf32>
    %295 = arith.mulf %290, %294 : vector<8x32xf32>
    %296 = arith.truncf %295 : vector<8x32xf32> to vector<8x32xbf16>
    %cst_59 = arith.constant dense<0.000000e+00> : vector<8x128xf32>
    %297 = tpu.matmul %296, %9, %cst_59 {dimension_numbers = #tpu.dot_dimension_numbers<[1], [0], [0], [1], [0, 0, 1, 1], [], []>} : vector<8x32xbf16>, vector<32x128xbf16>, vector<8x128xf32> -> vector<8x128xf32>
    %298 = arith.addf %297, %265 : vector<8x128xf32>
    %299 = vector.broadcast %11 : vector<1x128xf32> to vector<8x128xf32>
    %300 = arith.addf %298, %299 : vector<8x128xf32>
    %301 = vector.extract_strided_slice %300 {offsets = [0, 0], sizes = [8, 32], strides = [1, 1]} : vector<8x128xf32> to vector<8x32xf32>
    %302 = arith.negf %301 : vector<8x32xf32>
    %303 = math.exp %302 : vector<8x32xf32>
    %cst_60 = arith.constant 1.000000e+00 : f32
    %304 = vector.broadcast %cst_60 : f32 to vector<8x32xf32>
    %305 = arith.addf %304, %303 : vector<8x32xf32>
    %306 = arith.divf %304, %305 : vector<8x32xf32>
    %307 = vector.extract_strided_slice %300 {offsets = [0, 32], sizes = [8, 32], strides = [1, 1]} : vector<8x128xf32> to vector<8x32xf32>
    %308 = arith.negf %307 : vector<8x32xf32>
    %309 = math.exp %308 : vector<8x32xf32>
    %cst_61 = arith.constant 1.000000e+00 : f32
    %310 = vector.broadcast %cst_61 : f32 to vector<8x32xf32>
    %311 = arith.addf %310, %309 : vector<8x32xf32>
    %312 = arith.divf %310, %311 : vector<8x32xf32>
    %313 = vector.extract_strided_slice %300 {offsets = [0, 64], sizes = [8, 32], strides = [1, 1]} : vector<8x128xf32> to vector<8x32xf32>
    %314 = math.tanh %313 : vector<8x32xf32>
    %315 = vector.extract_strided_slice %300 {offsets = [0, 96], sizes = [8, 32], strides = [1, 1]} : vector<8x128xf32> to vector<8x32xf32>
    %316 = arith.negf %315 : vector<8x32xf32>
    %317 = math.exp %316 : vector<8x32xf32>
    %cst_62 = arith.constant 1.000000e+00 : f32
    %318 = vector.broadcast %cst_62 : f32 to vector<8x32xf32>
    %319 = arith.addf %318, %317 : vector<8x32xf32>
    %320 = arith.divf %318, %319 : vector<8x32xf32>
    %321 = arith.mulf %312, %261 : vector<8x32xf32>
    %322 = arith.mulf %306, %314 : vector<8x32xf32>
    %323 = arith.addf %321, %322 : vector<8x32xf32>
    %324 = math.tanh %323 : vector<8x32xf32>
    %325 = arith.mulf %320, %324 : vector<8x32xf32>
    %326 = arith.truncf %325 : vector<8x32xf32> to vector<8x32xbf16>
    %cst_63 = arith.constant dense<0.000000e+00> : vector<8x128xf32>
    %327 = tpu.matmul %326, %10, %cst_63 {dimension_numbers = #tpu.dot_dimension_numbers<[1], [0], [0], [1], [0, 0, 1, 1], [], []>} : vector<8x32xbf16>, vector<32x128xbf16>, vector<8x128xf32> -> vector<8x128xf32>
    %328 = vector.extract_strided_slice %7 {offsets = [5, 0, 0], sizes = [1, 8, 128], strides = [1, 1, 1]} : vector<8x8x128xf32> to vector<1x8x128xf32>
    %329 = vector.shape_cast %328 : vector<1x8x128xf32> to vector<8x128xf32>
    %330 = arith.truncf %295 : vector<8x32xf32> to vector<8x32xbf16>
    %cst_64 = arith.constant dense<0.000000e+00> : vector<8x128xf32>
    %331 = tpu.matmul %330, %8, %cst_64 {dimension_numbers = #tpu.dot_dimension_numbers<[1], [0], [0], [1], [0, 0, 1, 1], [], []>} : vector<8x32xbf16>, vector<32x128xbf16>, vector<8x128xf32> -> vector<8x128xf32>
    %332 = arith.addf %329, %331 : vector<8x128xf32>
    %333 = vector.extract_strided_slice %332 {offsets = [0, 0], sizes = [8, 32], strides = [1, 1]} : vector<8x128xf32> to vector<8x32xf32>
    %334 = arith.negf %333 : vector<8x32xf32>
    %335 = math.exp %334 : vector<8x32xf32>
    %cst_65 = arith.constant 1.000000e+00 : f32
    %336 = vector.broadcast %cst_65 : f32 to vector<8x32xf32>
    %337 = arith.addf %336, %335 : vector<8x32xf32>
    %338 = arith.divf %336, %337 : vector<8x32xf32>
    %339 = vector.extract_strided_slice %332 {offsets = [0, 32], sizes = [8, 32], strides = [1, 1]} : vector<8x128xf32> to vector<8x32xf32>
    %340 = arith.negf %339 : vector<8x32xf32>
    %341 = math.exp %340 : vector<8x32xf32>
    %cst_66 = arith.constant 1.000000e+00 : f32
    %342 = vector.broadcast %cst_66 : f32 to vector<8x32xf32>
    %343 = arith.addf %342, %341 : vector<8x32xf32>
    %344 = arith.divf %342, %343 : vector<8x32xf32>
    %345 = vector.extract_strided_slice %332 {offsets = [0, 64], sizes = [8, 32], strides = [1, 1]} : vector<8x128xf32> to vector<8x32xf32>
    %346 = math.tanh %345 : vector<8x32xf32>
    %347 = vector.extract_strided_slice %332 {offsets = [0, 96], sizes = [8, 32], strides = [1, 1]} : vector<8x128xf32> to vector<8x32xf32>
    %348 = arith.negf %347 : vector<8x32xf32>
    %349 = math.exp %348 : vector<8x32xf32>
    %cst_67 = arith.constant 1.000000e+00 : f32
    %350 = vector.broadcast %cst_67 : f32 to vector<8x32xf32>
    %351 = arith.addf %350, %349 : vector<8x32xf32>
    %352 = arith.divf %350, %351 : vector<8x32xf32>
    %353 = arith.mulf %344, %293 : vector<8x32xf32>
    %354 = arith.mulf %338, %346 : vector<8x32xf32>
    %355 = arith.addf %353, %354 : vector<8x32xf32>
    %356 = math.tanh %355 : vector<8x32xf32>
    %357 = arith.mulf %352, %356 : vector<8x32xf32>
    %358 = arith.truncf %357 : vector<8x32xf32> to vector<8x32xbf16>
    %cst_68 = arith.constant dense<0.000000e+00> : vector<8x128xf32>
    %359 = tpu.matmul %358, %9, %cst_68 {dimension_numbers = #tpu.dot_dimension_numbers<[1], [0], [0], [1], [0, 0, 1, 1], [], []>} : vector<8x32xbf16>, vector<32x128xbf16>, vector<8x128xf32> -> vector<8x128xf32>
    %360 = arith.addf %359, %327 : vector<8x128xf32>
    %361 = vector.broadcast %11 : vector<1x128xf32> to vector<8x128xf32>
    %362 = arith.addf %360, %361 : vector<8x128xf32>
    %363 = vector.extract_strided_slice %362 {offsets = [0, 0], sizes = [8, 32], strides = [1, 1]} : vector<8x128xf32> to vector<8x32xf32>
    %364 = arith.negf %363 : vector<8x32xf32>
    %365 = math.exp %364 : vector<8x32xf32>
    %cst_69 = arith.constant 1.000000e+00 : f32
    %366 = vector.broadcast %cst_69 : f32 to vector<8x32xf32>
    %367 = arith.addf %366, %365 : vector<8x32xf32>
    %368 = arith.divf %366, %367 : vector<8x32xf32>
    %369 = vector.extract_strided_slice %362 {offsets = [0, 32], sizes = [8, 32], strides = [1, 1]} : vector<8x128xf32> to vector<8x32xf32>
    %370 = arith.negf %369 : vector<8x32xf32>
    %371 = math.exp %370 : vector<8x32xf32>
    %cst_70 = arith.constant 1.000000e+00 : f32
    %372 = vector.broadcast %cst_70 : f32 to vector<8x32xf32>
    %373 = arith.addf %372, %371 : vector<8x32xf32>
    %374 = arith.divf %372, %373 : vector<8x32xf32>
    %375 = vector.extract_strided_slice %362 {offsets = [0, 64], sizes = [8, 32], strides = [1, 1]} : vector<8x128xf32> to vector<8x32xf32>
    %376 = math.tanh %375 : vector<8x32xf32>
    %377 = vector.extract_strided_slice %362 {offsets = [0, 96], sizes = [8, 32], strides = [1, 1]} : vector<8x128xf32> to vector<8x32xf32>
    %378 = arith.negf %377 : vector<8x32xf32>
    %379 = math.exp %378 : vector<8x32xf32>
    %cst_71 = arith.constant 1.000000e+00 : f32
    %380 = vector.broadcast %cst_71 : f32 to vector<8x32xf32>
    %381 = arith.addf %380, %379 : vector<8x32xf32>
    %382 = arith.divf %380, %381 : vector<8x32xf32>
    %383 = arith.mulf %374, %323 : vector<8x32xf32>
    %384 = arith.mulf %368, %376 : vector<8x32xf32>
    %385 = arith.addf %383, %384 : vector<8x32xf32>
    %386 = math.tanh %385 : vector<8x32xf32>
    %387 = arith.mulf %382, %386 : vector<8x32xf32>
    %388 = arith.truncf %387 : vector<8x32xf32> to vector<8x32xbf16>
    %cst_72 = arith.constant dense<0.000000e+00> : vector<8x128xf32>
    %389 = tpu.matmul %388, %10, %cst_72 {dimension_numbers = #tpu.dot_dimension_numbers<[1], [0], [0], [1], [0, 0, 1, 1], [], []>} : vector<8x32xbf16>, vector<32x128xbf16>, vector<8x128xf32> -> vector<8x128xf32>
    %390 = vector.extract_strided_slice %7 {offsets = [6, 0, 0], sizes = [1, 8, 128], strides = [1, 1, 1]} : vector<8x8x128xf32> to vector<1x8x128xf32>
    %391 = vector.shape_cast %390 : vector<1x8x128xf32> to vector<8x128xf32>
    %392 = arith.truncf %357 : vector<8x32xf32> to vector<8x32xbf16>
    %cst_73 = arith.constant dense<0.000000e+00> : vector<8x128xf32>
    %393 = tpu.matmul %392, %8, %cst_73 {dimension_numbers = #tpu.dot_dimension_numbers<[1], [0], [0], [1], [0, 0, 1, 1], [], []>} : vector<8x32xbf16>, vector<32x128xbf16>, vector<8x128xf32> -> vector<8x128xf32>
    %394 = arith.addf %391, %393 : vector<8x128xf32>
    %395 = vector.extract_strided_slice %394 {offsets = [0, 0], sizes = [8, 32], strides = [1, 1]} : vector<8x128xf32> to vector<8x32xf32>
    %396 = arith.negf %395 : vector<8x32xf32>
    %397 = math.exp %396 : vector<8x32xf32>
    %cst_74 = arith.constant 1.000000e+00 : f32
    %398 = vector.broadcast %cst_74 : f32 to vector<8x32xf32>
    %399 = arith.addf %398, %397 : vector<8x32xf32>
    %400 = arith.divf %398, %399 : vector<8x32xf32>
    %401 = vector.extract_strided_slice %394 {offsets = [0, 32], sizes = [8, 32], strides = [1, 1]} : vector<8x128xf32> to vector<8x32xf32>
    %402 = arith.negf %401 : vector<8x32xf32>
    %403 = math.exp %402 : vector<8x32xf32>
    %cst_75 = arith.constant 1.000000e+00 : f32
    %404 = vector.broadcast %cst_75 : f32 to vector<8x32xf32>
    %405 = arith.addf %404, %403 : vector<8x32xf32>
    %406 = arith.divf %404, %405 : vector<8x32xf32>
    %407 = vector.extract_strided_slice %394 {offsets = [0, 64], sizes = [8, 32], strides = [1, 1]} : vector<8x128xf32> to vector<8x32xf32>
    %408 = math.tanh %407 : vector<8x32xf32>
    %409 = vector.extract_strided_slice %394 {offsets = [0, 96], sizes = [8, 32], strides = [1, 1]} : vector<8x128xf32> to vector<8x32xf32>
    %410 = arith.negf %409 : vector<8x32xf32>
    %411 = math.exp %410 : vector<8x32xf32>
    %cst_76 = arith.constant 1.000000e+00 : f32
    %412 = vector.broadcast %cst_76 : f32 to vector<8x32xf32>
    %413 = arith.addf %412, %411 : vector<8x32xf32>
    %414 = arith.divf %412, %413 : vector<8x32xf32>
    %415 = arith.mulf %406, %355 : vector<8x32xf32>
    %416 = arith.mulf %400, %408 : vector<8x32xf32>
    %417 = arith.addf %415, %416 : vector<8x32xf32>
    %418 = math.tanh %417 : vector<8x32xf32>
    %419 = arith.mulf %414, %418 : vector<8x32xf32>
    %420 = arith.truncf %419 : vector<8x32xf32> to vector<8x32xbf16>
    %cst_77 = arith.constant dense<0.000000e+00> : vector<8x128xf32>
    %421 = tpu.matmul %420, %9, %cst_77 {dimension_numbers = #tpu.dot_dimension_numbers<[1], [0], [0], [1], [0, 0, 1, 1], [], []>} : vector<8x32xbf16>, vector<32x128xbf16>, vector<8x128xf32> -> vector<8x128xf32>
    %422 = arith.addf %421, %389 : vector<8x128xf32>
    %423 = vector.broadcast %11 : vector<1x128xf32> to vector<8x128xf32>
    %424 = arith.addf %422, %423 : vector<8x128xf32>
    %425 = vector.extract_strided_slice %424 {offsets = [0, 0], sizes = [8, 32], strides = [1, 1]} : vector<8x128xf32> to vector<8x32xf32>
    %426 = arith.negf %425 : vector<8x32xf32>
    %427 = math.exp %426 : vector<8x32xf32>
    %cst_78 = arith.constant 1.000000e+00 : f32
    %428 = vector.broadcast %cst_78 : f32 to vector<8x32xf32>
    %429 = arith.addf %428, %427 : vector<8x32xf32>
    %430 = arith.divf %428, %429 : vector<8x32xf32>
    %431 = vector.extract_strided_slice %424 {offsets = [0, 32], sizes = [8, 32], strides = [1, 1]} : vector<8x128xf32> to vector<8x32xf32>
    %432 = arith.negf %431 : vector<8x32xf32>
    %433 = math.exp %432 : vector<8x32xf32>
    %cst_79 = arith.constant 1.000000e+00 : f32
    %434 = vector.broadcast %cst_79 : f32 to vector<8x32xf32>
    %435 = arith.addf %434, %433 : vector<8x32xf32>
    %436 = arith.divf %434, %435 : vector<8x32xf32>
    %437 = vector.extract_strided_slice %424 {offsets = [0, 64], sizes = [8, 32], strides = [1, 1]} : vector<8x128xf32> to vector<8x32xf32>
    %438 = math.tanh %437 : vector<8x32xf32>
    %439 = vector.extract_strided_slice %424 {offsets = [0, 96], sizes = [8, 32], strides = [1, 1]} : vector<8x128xf32> to vector<8x32xf32>
    %440 = arith.negf %439 : vector<8x32xf32>
    %441 = math.exp %440 : vector<8x32xf32>
    %cst_80 = arith.constant 1.000000e+00 : f32
    %442 = vector.broadcast %cst_80 : f32 to vector<8x32xf32>
    %443 = arith.addf %442, %441 : vector<8x32xf32>
    %444 = arith.divf %442, %443 : vector<8x32xf32>
    %445 = arith.mulf %436, %385 : vector<8x32xf32>
    %446 = arith.mulf %430, %438 : vector<8x32xf32>
    %447 = arith.addf %445, %446 : vector<8x32xf32>
    %448 = math.tanh %447 : vector<8x32xf32>
    %449 = arith.mulf %444, %448 : vector<8x32xf32>
    %450 = arith.truncf %449 : vector<8x32xf32> to vector<8x32xbf16>
    %cst_81 = arith.constant dense<0.000000e+00> : vector<8x128xf32>
    %451 = tpu.matmul %450, %10, %cst_81 {dimension_numbers = #tpu.dot_dimension_numbers<[1], [0], [0], [1], [0, 0, 1, 1], [], []>} : vector<8x32xbf16>, vector<32x128xbf16>, vector<8x128xf32> -> vector<8x128xf32>
    %452 = vector.extract_strided_slice %7 {offsets = [7, 0, 0], sizes = [1, 8, 128], strides = [1, 1, 1]} : vector<8x8x128xf32> to vector<1x8x128xf32>
    %453 = vector.shape_cast %452 : vector<1x8x128xf32> to vector<8x128xf32>
    %454 = arith.truncf %419 : vector<8x32xf32> to vector<8x32xbf16>
    %cst_82 = arith.constant dense<0.000000e+00> : vector<8x128xf32>
    %455 = tpu.matmul %454, %8, %cst_82 {dimension_numbers = #tpu.dot_dimension_numbers<[1], [0], [0], [1], [0, 0, 1, 1], [], []>} : vector<8x32xbf16>, vector<32x128xbf16>, vector<8x128xf32> -> vector<8x128xf32>
    %456 = arith.addf %453, %455 : vector<8x128xf32>
    %457 = vector.extract_strided_slice %456 {offsets = [0, 0], sizes = [8, 32], strides = [1, 1]} : vector<8x128xf32> to vector<8x32xf32>
    %458 = arith.negf %457 : vector<8x32xf32>
    %459 = math.exp %458 : vector<8x32xf32>
    %cst_83 = arith.constant 1.000000e+00 : f32
    %460 = vector.broadcast %cst_83 : f32 to vector<8x32xf32>
    %461 = arith.addf %460, %459 : vector<8x32xf32>
    %462 = arith.divf %460, %461 : vector<8x32xf32>
    %463 = vector.extract_strided_slice %456 {offsets = [0, 32], sizes = [8, 32], strides = [1, 1]} : vector<8x128xf32> to vector<8x32xf32>
    %464 = arith.negf %463 : vector<8x32xf32>
    %465 = math.exp %464 : vector<8x32xf32>
    %cst_84 = arith.constant 1.000000e+00 : f32
    %466 = vector.broadcast %cst_84 : f32 to vector<8x32xf32>
    %467 = arith.addf %466, %465 : vector<8x32xf32>
    %468 = arith.divf %466, %467 : vector<8x32xf32>
    %469 = vector.extract_strided_slice %456 {offsets = [0, 64], sizes = [8, 32], strides = [1, 1]} : vector<8x128xf32> to vector<8x32xf32>
    %470 = math.tanh %469 : vector<8x32xf32>
    %471 = vector.extract_strided_slice %456 {offsets = [0, 96], sizes = [8, 32], strides = [1, 1]} : vector<8x128xf32> to vector<8x32xf32>
    %472 = arith.negf %471 : vector<8x32xf32>
    %473 = math.exp %472 : vector<8x32xf32>
    %cst_85 = arith.constant 1.000000e+00 : f32
    %474 = vector.broadcast %cst_85 : f32 to vector<8x32xf32>
    %475 = arith.addf %474, %473 : vector<8x32xf32>
    %476 = arith.divf %474, %475 : vector<8x32xf32>
    %477 = arith.mulf %468, %417 : vector<8x32xf32>
    %478 = arith.mulf %462, %470 : vector<8x32xf32>
    %479 = arith.addf %477, %478 : vector<8x32xf32>
    %480 = math.tanh %479 : vector<8x32xf32>
    %481 = arith.mulf %476, %480 : vector<8x32xf32>
    %482 = arith.truncf %481 : vector<8x32xf32> to vector<8x32xbf16>
    %cst_86 = arith.constant dense<0.000000e+00> : vector<8x128xf32>
    %483 = tpu.matmul %482, %9, %cst_86 {dimension_numbers = #tpu.dot_dimension_numbers<[1], [0], [0], [1], [0, 0, 1, 1], [], []>} : vector<8x32xbf16>, vector<32x128xbf16>, vector<8x128xf32> -> vector<8x128xf32>
    %484 = arith.addf %483, %451 : vector<8x128xf32>
    %485 = vector.broadcast %11 : vector<1x128xf32> to vector<8x128xf32>
    %486 = arith.addf %484, %485 : vector<8x128xf32>
    %487 = vector.extract_strided_slice %486 {offsets = [0, 0], sizes = [8, 32], strides = [1, 1]} : vector<8x128xf32> to vector<8x32xf32>
    %488 = arith.negf %487 : vector<8x32xf32>
    %489 = math.exp %488 : vector<8x32xf32>
    %cst_87 = arith.constant 1.000000e+00 : f32
    %490 = vector.broadcast %cst_87 : f32 to vector<8x32xf32>
    %491 = arith.addf %490, %489 : vector<8x32xf32>
    %492 = arith.divf %490, %491 : vector<8x32xf32>
    %493 = vector.extract_strided_slice %486 {offsets = [0, 32], sizes = [8, 32], strides = [1, 1]} : vector<8x128xf32> to vector<8x32xf32>
    %494 = arith.negf %493 : vector<8x32xf32>
    %495 = math.exp %494 : vector<8x32xf32>
    %cst_88 = arith.constant 1.000000e+00 : f32
    %496 = vector.broadcast %cst_88 : f32 to vector<8x32xf32>
    %497 = arith.addf %496, %495 : vector<8x32xf32>
    %498 = arith.divf %496, %497 : vector<8x32xf32>
    %499 = vector.extract_strided_slice %486 {offsets = [0, 64], sizes = [8, 32], strides = [1, 1]} : vector<8x128xf32> to vector<8x32xf32>
    %500 = math.tanh %499 : vector<8x32xf32>
    %501 = vector.extract_strided_slice %486 {offsets = [0, 96], sizes = [8, 32], strides = [1, 1]} : vector<8x128xf32> to vector<8x32xf32>
    %502 = arith.negf %501 : vector<8x32xf32>
    %503 = math.exp %502 : vector<8x32xf32>
    %cst_89 = arith.constant 1.000000e+00 : f32
    %504 = vector.broadcast %cst_89 : f32 to vector<8x32xf32>
    %505 = arith.addf %504, %503 : vector<8x32xf32>
    %506 = arith.divf %504, %505 : vector<8x32xf32>
    %507 = arith.mulf %498, %447 : vector<8x32xf32>
    %508 = arith.mulf %492, %500 : vector<8x32xf32>
    %509 = arith.addf %507, %508 : vector<8x32xf32>
    %510 = math.tanh %509 : vector<8x32xf32>
    %511 = arith.mulf %506, %510 : vector<8x32xf32>
    %512 = vector.extract_strided_slice %509 {offsets = [7, 0], sizes = [1, 32], strides = [1, 1]} : vector<8x32xf32> to vector<1x32xf32>
    %513 = math.tanh %512 : vector<1x32xf32>
    %c0_90 = arith.constant 0 : index
    %c0_91 = arith.constant 0 : index
    %514 = vector.load %arg7[%c0_90, %c0_91] : memref<1x32xf32, #tpu.memory_space<vmem>>, vector<1x32xf32>
    %515 = arith.mulf %514, %512 : vector<1x32xf32>
    %516 = vector.broadcast %515 : vector<1x32xf32> to vector<8x32xf32>
    %517 = arith.addf %511, %516 : vector<8x32xf32>
    %518 = arith.negf %517 : vector<8x32xf32>
    %519 = math.exp %518 : vector<8x32xf32>
    %cst_92 = arith.constant 1.000000e+00 : f32
    %520 = vector.broadcast %cst_92 : f32 to vector<8x32xf32>
    %521 = arith.addf %520, %519 : vector<8x32xf32>
    %522 = arith.divf %520, %521 : vector<8x32xf32>
    %c0_93 = arith.constant 0 : index
    %c0_94 = arith.constant 0 : index
    %523 = vector.load %arg8[%c0_93, %c0_94] : memref<1x32xf32, #tpu.memory_space<vmem>>, vector<1x32xf32>
    %524 = arith.mulf %523, %512 : vector<1x32xf32>
    %525 = vector.broadcast %524 : vector<1x32xf32> to vector<8x32xf32>
    %526 = arith.addf %511, %525 : vector<8x32xf32>
    %527 = arith.negf %526 : vector<8x32xf32>
    %528 = math.exp %527 : vector<8x32xf32>
    %cst_95 = arith.constant 1.000000e+00 : f32
    %529 = vector.broadcast %cst_95 : f32 to vector<8x32xf32>
    %530 = arith.addf %529, %528 : vector<8x32xf32>
    %531 = arith.divf %529, %530 : vector<8x32xf32>
    %c0_96 = arith.constant 0 : index
    %c0_97 = arith.constant 0 : index
    %532 = vector.load %arg9[%c0_96, %c0_97] : memref<1x32xf32, #tpu.memory_space<vmem>>, vector<1x32xf32>
    %533 = arith.mulf %532, %512 : vector<1x32xf32>
    %534 = vector.broadcast %533 : vector<1x32xf32> to vector<8x32xf32>
    %535 = arith.addf %511, %534 : vector<8x32xf32>
    %536 = arith.negf %535 : vector<8x32xf32>
    %537 = math.exp %536 : vector<8x32xf32>
    %cst_98 = arith.constant 1.000000e+00 : f32
    %538 = vector.broadcast %cst_98 : f32 to vector<8x32xf32>
    %539 = arith.addf %538, %537 : vector<8x32xf32>
    %540 = arith.divf %538, %539 : vector<8x32xf32>
    %541 = vector.broadcast %513 : vector<1x32xf32> to vector<8x32xf32>
    %542 = arith.mulf %531, %541 : vector<8x32xf32>
    %543 = vector.broadcast %512 : vector<1x32xf32> to vector<8x32xf32>
    %544 = arith.mulf %522, %543 : vector<8x32xf32>
    %545 = arith.addf %542, %544 : vector<8x32xf32>
    %546 = math.tanh %545 : vector<8x32xf32>
    %547 = arith.mulf %540, %546 : vector<8x32xf32>
    %c0_99 = arith.constant 0 : index
    %c0_100 = arith.constant 0 : index
    %548 = vector.load %arg10[%c0_99, %c0_100] : memref<8x32xf32, #tpu.memory_space<vmem>>, vector<8x32xf32>
    tpu.vector_store %arg10[%c0_99, %c0_100], %547 {strides = array<i32>} : memref<8x32xf32, #tpu.memory_space<vmem>>, vector<8x32xf32>,
    return
  }
}

</mosaic_0001>

<llo_original>
// kernel: tpu_custom_call.1
$region0: #{tpu_custom_call.1}
  #allocation0 [shape = 'u32[]', space=smem, size = 0x4, offset = 0x4, fixed_abs, tag = 'smem constant byte address 0x4 - core index']
  #allocation1 [shape = 'u32[144,128]{1,0:T(1,128)}', space=vmem, size = 0x12000, scoped, tag = 'internal scratch']
  %s0 = inlined_call_operand.hbm [shape: bf16[8,8,16], index: 0, kind: input, shape index: {}]
  %s1 = inlined_call_operand.hbm [shape: bf16[16,128], index: 1, kind: input, shape index: {}]
  %s2 = inlined_call_operand.hbm [shape: bf16[32,128], index: 2, kind: input, shape index: {}]
  %s3 = inlined_call_operand.vmem [shape: f32[1,128], index: 3, kind: input, shape index: {}]
  %s4 = inlined_call_operand.hbm [shape: bf16[32,128], index: 4, kind: input, shape index: {}]
  %s5 = inlined_call_operand.vmem [shape: bf16[32,128], index: 5, kind: input, shape index: {}]
  %s6 = inlined_call_operand.vmem [shape: f32[1,128], index: 6, kind: input, shape index: {}]
  %s7 = inlined_call_operand.vmem [shape: f32[1,32], index: 7, kind: input, shape index: {}]
  %s8 = inlined_call_operand.vmem [shape: f32[1,32], index: 8, kind: input, shape index: {}]
  %s9 = inlined_call_operand.vmem [shape: f32[1,32], index: 9, kind: input, shape index: {}]
  %s10 = inlined_call_operand.hbm [shape: f32[8,32], index: 10, kind: output, shape index: {}]
  %s11 = sld [smem:[#allocation0]]
  $region66: #{tpu_custom_call.1} parent=0
    _
  %s13 = ssub.s32 1, %s11
  %s14 = scalar_select 0, %s13, %s11
  $region1: #{tpu_custom_call.1} parent=0
    #allocation2 [shape = 'u8[16384]{0}', space=vmem, size = 0x4000, scoped, tag = 'input window, operand 0, single buffered']
    #allocation3 [shape = 's32[1]{0}', space=sflag, size = 0x4, scoped, tag = 'scoped memory for tpu_custom_call.1']
    #allocation4 [shape = 's32[1]{0}', space=sflag, size = 0x4, scoped, tag = 'scoped memory for tpu_custom_call.1']
    #allocation5 [shape = 'u8[4096]{0}', space=vmem, size = 0x1000, scoped, tag = 'input window, operand 1, single buffered']
    #allocation6 [shape = 's32[1]{0}', space=sflag, size = 0x4, scoped, tag = 'scoped memory for tpu_custom_call.1']
    #allocation7 [shape = 'u8[8192]{0}', space=vmem, size = 0x2000, scoped, tag = 'input window, operand 2, single buffered']
    #allocation8 [shape = 'u8[8192]{0}', space=vmem, size = 0x2000, scoped, tag = 'input window, operand 4, single buffered']
    #allocation9 [shape = 's32[1]{0}', space=sflag, size = 0x4, scoped, tag = 'scoped memory for tpu_custom_call.1']
    #allocation10 [shape = 'u8[4096]{0}', space=vmem, size = 0x1000, scoped, tag = 'output window, operand 0, single buffered']
    %15 = vsyncpa [#allocation3], 0
    %16 = vsyncpa [#allocation6], 0
    %17 = vsyncpa [#allocation9], 0
    %18 = vsyncpa [#allocation4], 0
    // Predicated region
    $region2: #{tpu_custom_call.1} parent=1 // pred_check
      _
    $region3: #{tpu_custom_call.1} parent=1 // pred_check_branch
      %20 = sbr.rel (0) target = $region5
    $region4: #{tpu_custom_call.1} parent=1 // pred_region
      %s22 = ssub.s32 512, 512
      %23 = vsyncadd [#allocation3], %s22
      %s24 = sshll.u32 [#allocation2], 4
      %s25 = int_to_ptr.vmem [resolvable:$true] %s24
      %30 = dma.hbm_to_vmem [thread:$0]  %s0, 512, %s25, [#allocation3], 64, 64, 4
    $region5: #{tpu_custom_call.1} parent=1 // pred_fallthru
      _
    // Predicated region
    $region6: #{tpu_custom_call.1} parent=1 // pred_check
      _
    $region7: #{tpu_custom_call.1} parent=1 // pred_check_branch
      %32 = sbr.rel (0) target = $region9
    $region8: #{tpu_custom_call.1} parent=1 // pred_region
      %s34 = ssub.s32 128, 128
      %35 = vsyncadd [#allocation6], %s34
      %s36 = sshll.u32 [#allocation5], 4
      %s37 = int_to_ptr.vmem [resolvable:$true] %s36
      %42 = dma.hbm_to_vmem [thread:$0]  %s1, 128, %s37, [#allocation6], 64, 64, 4
    $region9: #{tpu_custom_call.1} parent=1 // pred_fallthru
      _
    // Predicated region
    $region10: #{tpu_custom_call.1} parent=1 // pred_check
      _
    $region11: #{tpu_custom_call.1} parent=1 // pred_check_branch
      %44 = sbr.rel (0) target = $region13
    $region12: #{tpu_custom_call.1} parent=1 // pred_region
      %s46 = ssub.s32 256, 256
      %47 = vsyncadd [#allocation6], %s46
      %s48 = sshll.u32 [#allocation7], 4
      %s49 = int_to_ptr.vmem [resolvable:$true] %s48
      %54 = dma.hbm_to_vmem [thread:$0]  %s2, 256, %s49, [#allocation6], 64, 64, 4
    $region13: #{tpu_custom_call.1} parent=1 // pred_fallthru
      _
    // Predicated region
    $region14: #{tpu_custom_call.1} parent=1 // pred_check
      _
    $region15: #{tpu_custom_call.1} parent=1 // pred_check_branch
      %56 = sbr.rel (0) target = $region17
    $region16: #{tpu_custom_call.1} parent=1 // pred_region
      _
    $region17: #{tpu_custom_call.1} parent=1 // pred_fallthru
      _
    // Predicated region
    $region18: #{tpu_custom_call.1} parent=1 // pred_check
      _
    $region19: #{tpu_custom_call.1} parent=1 // pred_check_branch
      %58 = sbr.rel (0) target = $region21
    $region20: #{tpu_custom_call.1} parent=1 // pred_region
      %s60 = ssub.s32 256, 256
      %61 = vsyncadd [#allocation9], %s60
      %s62 = sshll.u32 [#allocation8], 4
      %s63 = int_to_ptr.vmem [resolvable:$true] %s62
      %68 = dma.hbm_to_vmem [thread:$0]  %s4, 256, %s63, [#allocation9], 64, 64, 4
    $region21: #{tpu_custom_call.1} parent=1 // pred_fallthru
      _
    // Predicated region
    $region22: #{tpu_custom_call.1} parent=1 // pred_check
      _
    $region23: #{tpu_custom_call.1} parent=1 // pred_check_branch
      %70 = sbr.rel (0) target = $region25
    $region24: #{tpu_custom_call.1} parent=1 // pred_region
      _
    $region25: #{tpu_custom_call.1} parent=1 // pred_fallthru
      _
    // Predicated region
    $region26: #{tpu_custom_call.1} parent=1 // pred_check
      _
    $region27: #{tpu_custom_call.1} parent=1 // pred_check_branch
      %72 = sbr.rel (0) target = $region29
    $region28: #{tpu_custom_call.1} parent=1 // pred_region
      _
    $region29: #{tpu_custom_call.1} parent=1 // pred_fallthru
      _
    // Predicated region
    $region30: #{tpu_custom_call.1} parent=1 // pred_check
      _
    $region31: #{tpu_custom_call.1} parent=1 // pred_check_branch
      %74 = sbr.rel (0) target = $region33
    $region32: #{tpu_custom_call.1} parent=1 // pred_region
      _
    $region33: #{tpu_custom_call.1} parent=1 // pred_fallthru
      _
    // Predicated region
    $region34: #{tpu_custom_call.1} parent=1 // pred_check
      _
    $region35: #{tpu_custom_call.1} parent=1 // pred_check_branch
      %76 = sbr.rel (0) target = $region37
    $region36: #{tpu_custom_call.1} parent=1 // pred_region
      _
    $region37: #{tpu_custom_call.1} parent=1 // pred_fallthru
      _
    // Predicated region
    $region38: #{tpu_custom_call.1} parent=1 // pred_check
      _
    $region39: #{tpu_custom_call.1} parent=1 // pred_check_branch
      %78 = sbr.rel (0) target = $region41
    $region40: #{tpu_custom_call.1} parent=1 // pred_region
      _
    $region41: #{tpu_custom_call.1} parent=1 // pred_fallthru
      _
    // Predicated region
    $region42: #{tpu_custom_call.1} parent=1 // pred_check
      _
    $region43: #{tpu_custom_call.1} parent=1 // pred_check_branch
      %80 = sbr.rel (0) target = $region45
    $region44: #{tpu_custom_call.1} parent=1 // pred_region
      %81 = dma.done [#allocation3], 512
    $region45: #{tpu_custom_call.1} parent=1 // pred_fallthru
      _
    // Predicated region
    $region46: #{tpu_custom_call.1} parent=1 // pred_check
      _
    $region47: #{tpu_custom_call.1} parent=1 // pred_check_branch
      %83 = sbr.rel (0) target = $region49
    $region48: #{tpu_custom_call.1} parent=1 // pred_region
      %84 = dma.done [#allocation6], 128
    $region49: #{tpu_custom_call.1} parent=1 // pred_fallthru
      _
    // Predicated region
    $region50: #{tpu_custom_call.1} parent=1 // pred_check
      _
    $region51: #{tpu_custom_call.1} parent=1 // pred_check_branch
      %86 = sbr.rel (0) target = $region53
    $region52: #{tpu_custom_call.1} parent=1 // pred_region
      %87 = dma.done [#allocation6], 256
    $region53: #{tpu_custom_call.1} parent=1 // pred_fallthru
      _
    // Predicated region
    $region54: #{tpu_custom_call.1} parent=1 // pred_check
      _
    $region55: #{tpu_custom_call.1} parent=1 // pred_check_branch
      %89 = sbr.rel (0) target = $region57
    $region56: #{tpu_custom_call.1} parent=1 // pred_region
      %90 = dma.done [#allocation9], 256
    $region57: #{tpu_custom_call.1} parent=1 // pred_fallthru
      _
    %v92 = vld [vmem:[#allocation2] sm:$0xf]
    %v93 = vld [vmem:[#allocation2 + $0x4] sm:$0xf]
    %v94 = vld [vmem:[#allocation2 + $0x8] sm:$0xf]
    %v95 = vld [vmem:[#allocation2 + $0xc] sm:$0xf]
    %v96 = vld [vmem:[#allocation2 + $0x10] sm:$0xf]
    %v97 = vld [vmem:[#allocation2 + $0x14] sm:$0xf]
    %v98 = vld [vmem:[#allocation2 + $0x18] sm:$0xf]
    %v99 = vld [vmem:[#allocation2 + $0x1c] sm:$0xf]
    %v100 = vld [vmem:[#allocation5] sm:$0xf]
    %v101 = vld [vmem:[#allocation5 + $0x4] sm:$0xf]
    %v102 = vld [vmem:[%s3] sm:$0x1]
    %v104 = vlaneseq
    %v105 = vshrl.u32 %v104, 7
    %v106 = vsub.s32 0, %v105
    %v107 = vrot.slane %v102, %v106
    %v117 = vunpack.c.l.b16 %v92
    %v118 = vunpack.c.l.b16 %v93
    %v119 = vunpack.c.l.b16 %v94
    %v120 = vunpack.c.l.b16 %v95
    %v121 = vunpack.c.l.b16 %v96
    %v122 = vunpack.c.l.b16 %v97
    %v123 = vunpack.c.l.b16 %v98
    %v124 = vunpack.c.l.b16 %v99
    %v125 = vpack.c.b16 %v118, %v117
    %v126 = vpack.c.b16 %v120, %v119
    %v127 = vpack.c.b16 %v122, %v121
    %v128 = vpack.c.b16 %v124, %v123
    %v131 = vunpack.c.l.b16 %v100
    %v132 = vunpack.c.l.b16 %v101
    %v133 = vpack.c.b16 %v132, %v131
    %vm135 = vcmask 130048
    %v137 = vsel %vm135, %v125, 0
    %v140 = vsel %vm135, %v126, 0
    %v143 = vsel %vm135, %v127, 0
    %v146 = vsel %vm135, %v128, 0
    %148 = vmatprep.subr.bf16.mxu0 0
    %149 = vmatpush1.bf16.msra.mxu0 %v133
    %150 = vmatprep.subr.bf16.mxu0 0
    %151 = vmatpush1.bf16.msra.mxu0 0
    %152 = vmatprep.subr.bf16.mxu0 0
    %153 = vmatpush1.bf16.msra.mxu0 0
    %154 = vmatprep.subr.bf16.mxu0 0
    %155 = vmatpush1.bf16.msra.mxu0 0
    %156 = vmatprep.subr.bf16.mxu0 0
    %157 = vmatpush1.bf16.msra.mxu0 0
    %158 = vmatprep.subr.bf16.mxu0 0
    %159 = vmatpush1.bf16.msra.mxu0 0
    %160 = vmatprep.subr.bf16.mxu0 0
    %161 = vmatpush1.bf16.msra.mxu0 0
    %162 = vmatprep.subr.bf16.mxu0 0
    %163 = vmatpush1.bf16.msra.mxu0 0
    %164 = vmatprep.subr.bf16.mxu0 0
    %165 = vmatpush1.bf16.msra.mxu0 0
    %166 = vmatprep.subr.bf16.mxu0 0
    %167 = vmatpush1.bf16.msra.mxu0 0
    %168 = vmatprep.subr.bf16.mxu0 0
    %169 = vmatpush1.bf16.msra.mxu0 0
    %170 = vmatprep.subr.bf16.mxu0 0
    %171 = vmatpush1.bf16.msra.mxu0 0
    %172 = vmatprep.subr.bf16.mxu0 0
    %173 = vmatpush1.bf16.msra.mxu0 0
    %174 = vmatprep.subr.bf16.mxu0 0
    %175 = vmatpush1.bf16.msra.mxu0 0
    %176 = vmatprep.subr.bf16.mxu0 0
    %177 = vmatpush1.bf16.msra.mxu0 0
    %178 = vmatprep.subr.bf16.mxu0 0
    %179 = vmatpush1.bf16.msra.mxu0 0
    %180 = vmatprep.mubr.bf16.mxu0 0
    %181 = vmatmul.mubr.bf16.gmra.mrb[0].mxu0 %v137
    %v182 = vpop.f32.mrb[0].mxu0
    %v183 = vadd.f32 %v107, %v182
    %v184 = vpop.f32.mrb[0].mxu0
    %v185 = vpop.f32.mrb[0].mxu0
    %v186 = vadd.f32 %v107, %v185
    %v187 = vpop.f32.mrb[0].mxu0
    %188 = vmatprep.mubr.bf16.mxu0 0
    %189 = vmatmul.mubr.bf16.gmra.mrb[0].mxu0 %v140
    %v190 = vpop.f32.mrb[0].mxu0
    %v191 = vadd.f32 %v107, %v190
    %v192 = vpop.f32.mrb[0].mxu0
    %v193 = vpop.f32.mrb[0].mxu0
    %v194 = vadd.f32 %v107, %v193
    %v195 = vpop.f32.mrb[0].mxu0
    %196 = vmatprep.mubr.bf16.mxu0 0
    %197 = vmatmul.mubr.bf16.gmra.mrb[0].mxu0 %v143
    %v198 = vpop.f32.mrb[0].mxu0
    %v199 = vadd.f32 %v107, %v198
    %v200 = vpop.f32.mrb[0].mxu0
    %v201 = vpop.f32.mrb[0].mxu0
    %v202 = vadd.f32 %v107, %v201
    %v203 = vpop.f32.mrb[0].mxu0
    %204 = vmatprep.mubr.bf16.mxu0 0
    %205 = vmatmul.mubr.bf16.gmra.mrb[0].mxu0 %v146
    %v206 = vpop.f32.mrb[0].mxu0
    %v207 = vadd.f32 %v107, %v206
    %v208 = vpop.f32.mrb[0].mxu0
    %v209 = vpop.f32.mrb[0].mxu0
    %v210 = vadd.f32 %v107, %v209
    %v211 = vpop.f32.mrb[0].mxu0
    %212 = vdwg.mxu0
    %v213 = vld [vmem:[#allocation7] sm:$0xf]
    %v214 = vld [vmem:[#allocation7 + $0x4] sm:$0xf]
    %v215 = vld [vmem:[#allocation7 + $0x8] sm:$0xf]
    %v216 = vld [vmem:[#allocation7 + $0xc] sm:$0xf]
    %v217 = vld [vmem:[#allocation8] sm:$0xf]
    %v218 = vld [vmem:[#allocation8 + $0x4] sm:$0xf]
    %v219 = vld [vmem:[#allocation8 + $0x8] sm:$0xf]
    %v220 = vld [vmem:[#allocation8 + $0xc] sm:$0xf]
    %v221 = vld [vmem:[%s5] sm:$0xf]
    %v222 = vld [vmem:[%s5 + $0x4] sm:$0xf]
    %v223 = vld [vmem:[%s5 + $0x8] sm:$0xf]
    %v224 = vld [vmem:[%s5 + $0xc] sm:$0xf]
    %v225 = vld [vmem:[%s6] sm:$0x1]
    %v230 = vunpack.c.l.b16 %v221
    %v231 = vunpack.c.l.b16 %v222
    %v232 = vunpack.c.l.b16 %v223
    %v233 = vunpack.c.l.b16 %v224
    %v234 = vpack.c.b16 %v231, %v230
    %v235 = vpack.c.b16 %v233, %v232
    %vm238 = vcmask 261120
    %v240 = vsel %vm238, 0, 0
    %242 = vmatprep.subr.bf16.mxu0 0
    %243 = vmatpush1.bf16.msra.mxu0 %v234
    %244 = vmatprep.subr.bf16.mxu0 0
    %245 = vmatpush1.bf16.msra.mxu0 %v235
    %246 = vmatprep.subr.bf16.mxu0 0
    %247 = vmatpush1.bf16.msra.mxu0 0
    %248 = vmatprep.subr.bf16.mxu0 0
    %249 = vmatpush1.bf16.msra.mxu0 0
    %250 = vmatprep.subr.bf16.mxu0 0
    %251 = vmatpush1.bf16.msra.mxu0 0
    %252 = vmatprep.subr.bf16.mxu0 0
    %253 = vmatpush1.bf16.msra.mxu0 0
    %254 = vmatprep.subr.bf16.mxu0 0
    %255 = vmatpush1.bf16.msra.mxu0 0
    %256 = vmatprep.subr.bf16.mxu0 0
    %257 = vmatpush1.bf16.msra.mxu0 0
    %258 = vmatprep.subr.bf16.mxu0 0
    %259 = vmatpush1.bf16.msra.mxu0 0
    %260 = vmatprep.subr.bf16.mxu0 0
    %261 = vmatpush1.bf16.msra.mxu0 0
    %262 = vmatprep.subr.bf16.mxu0 0
    %263 = vmatpush1.bf16.msra.mxu0 0
    %264 = vmatprep.subr.bf16.mxu0 0
    %265 = vmatpush1.bf16.msra.mxu0 0
    %266 = vmatprep.subr.bf16.mxu0 0
    %267 = vmatpush1.bf16.msra.mxu0 0
    %268 = vmatprep.subr.bf16.mxu0 0
    %269 = vmatpush1.bf16.msra.mxu0 0
    %270 = vmatprep.subr.bf16.mxu0 0
    %271 = vmatpush1.bf16.msra.mxu0 0
    %272 = vmatprep.subr.bf16.mxu0 0
    %273 = vmatpush1.bf16.msra.mxu0 0
    %274 = vmatprep.mubr.bf16.mxu0 0
    %275 = vmatmul.mubr.bf16.gmra.mrb[0].mxu0 %v240
    %v276 = vpop.f32.mrb[0].mxu0
    %v277 = vadd.f32 0.0, %v276
    %v278 = vpop.f32.mrb[0].mxu0
    %v279 = vpop.f32.mrb[0].mxu0
    %v280 = vpop.f32.mrb[0].mxu0
    %281 = vdwg.mxu0
    %v286 = vunpack.c.l.b16 %v213
    %v287 = vunpack.c.l.b16 %v214
    %v288 = vunpack.c.l.b16 %v215
    %v289 = vunpack.c.l.b16 %v216
    %v290 = vpack.c.b16 %v287, %v286
    %v291 = vpack.c.b16 %v289, %v288
    %294 = vmatprep.subr.bf16.mxu0 0
    %295 = vmatpush1.bf16.msra.mxu0 %v290
    %296 = vmatprep.subr.bf16.mxu0 0
    %297 = vmatpush1.bf16.msra.mxu0 %v291
    %298 = vmatprep.subr.bf16.mxu0 0
    %299 = vmatpush1.bf16.msra.mxu0 0
    %300 = vmatprep.subr.bf16.mxu0 0
    %301 = vmatpush1.bf16.msra.mxu0 0
    %302 = vmatprep.subr.bf16.mxu0 0
    %303 = vmatpush1.bf16.msra.mxu0 0
    %304 = vmatprep.subr.bf16.mxu0 0
    %305 = vmatpush1.bf16.msra.mxu0 0
    %306 = vmatprep.subr.bf16.mxu0 0
    %307 = vmatpush1.bf16.msra.mxu0 0
    %308 = vmatprep.subr.bf16.mxu0 0
    %309 = vmatpush1.bf16.msra.mxu0 0
    %310 = vmatprep.subr.bf16.mxu0 0
    %311 = vmatpush1.bf16.msra.mxu0 0
    %312 = vmatprep.subr.bf16.mxu0 0
    %313 = vmatpush1.bf16.msra.mxu0 0
    %314 = vmatprep.subr.bf16.mxu0 0
    %315 = vmatpush1.bf16.msra.mxu0 0
    %316 = vmatprep.subr.bf16.mxu0 0
    %317 = vmatpush1.bf16.msra.mxu0 0
    %318 = vmatprep.subr.bf16.mxu0 0
    %319 = vmatpush1.bf16.msra.mxu0 0
    %320 = vmatprep.subr.bf16.mxu0 0
    %321 = vmatpush1.bf16.msra.mxu0 0
    %322 = vmatprep.subr.bf16.mxu0 0
    %323 = vmatpush1.bf16.msra.mxu0 0
    %324 = vmatprep.subr.bf16.mxu0 0
    %325 = vmatpush1.bf16.msra.mxu0 0
    %326 = vmatprep.mubr.bf16.mxu0 0
    %327 = vmatmul.mubr.bf16.gmra.mrb[0].mxu0 %v240
    %v328 = vpop.f32.mrb[0].mxu0
    %v329 = vadd.f32 0.0, %v328
    %v330 = vpop.f32.mrb[0].mxu0
    %v331 = vpop.f32.mrb[0].mxu0
    %v332 = vpop.f32.mrb[0].mxu0
    %333 = vdwg.mxu0
    %v334 = vadd.f32 %v183, %v329
    %v335 = vxor.u32 %v334, 2147483648
    %v336 = vmul.f32 %v335, 1.442695
    %v337 = vpow.pop %v336
    %v338 = vadd.f32 %v337, 1.0
    %v339 = vrcp.pop %v338
    %v340 = vmul.f32 1.0, %v339
    %v341 = vtanh.pop %v334
    %v342 = vmul.f32 %v340, 0.0
    %344 = vrot.lane.b32.xlu0 %v341, 64
    %v345 = vpop.permute.xlu0 %344
    %v347 = vmul.f32 %v340, %v345
    %349 = vrot.lane.b32.xlu0 %v347, 32
    %v350 = vpop.permute.xlu0 %349
    %v352 = vadd.f32 %v342, %v350
    %v353 = vtanh.pop %v352
    %355 = vrot.lane.b32.xlu0 %v353, 64
    %v356 = vpop.permute.xlu0 %355
    %v358 = vmul.f32 %v340, %v356
    %v359 = vpack.c.bf16 %v358, %v358
    %361 = vrot.lane.b32.xlu0 %v359, 32
    %v362 = vpop.permute.xlu0 %361
    %v367 = vunpack.c.l.b16 %v217
    %v368 = vunpack.c.l.b16 %v218
    %v369 = vunpack.c.l.b16 %v219
    %v370 = vunpack.c.l.b16 %v220
    %v371 = vpack.c.b16 %v368, %v367
    %v372 = vpack.c.b16 %v370, %v369
    %v376 = vsel %vm238, %v362, 0
    %378 = vmatprep.subr.bf16.mxu0 0
    %379 = vmatpush1.bf16.msra.mxu0 %v371
    %380 = vmatprep.subr.bf16.mxu0 0
    %381 = vmatpush1.bf16.msra.mxu0 %v372
    %382 = vmatprep.subr.bf16.mxu0 0
    %383 = vmatpush1.bf16.msra.mxu0 0
    %384 = vmatprep.subr.bf16.mxu0 0
    %385 = vmatpush1.bf16.msra.mxu0 0
    %386 = vmatprep.subr.bf16.mxu0 0
    %387 = vmatpush1.bf16.msra.mxu0 0
    %388 = vmatprep.subr.bf16.mxu0 0
    %389 = vmatpush1.bf16.msra.mxu0 0
    %390 = vmatprep.subr.bf16.mxu0 0
    %391 = vmatpush1.bf16.msra.mxu0 0
    %392 = vmatprep.subr.bf16.mxu0 0
    %393 = vmatpush1.bf16.msra.mxu0 0
    %394 = vmatprep.subr.bf16.mxu0 0
    %395 = vmatpush1.bf16.msra.mxu0 0
    %396 = vmatprep.subr.bf16.mxu0 0
    %397 = vmatpush1.bf16.msra.mxu0 0
    %398 = vmatprep.subr.bf16.mxu0 0
    %399 = vmatpush1.bf16.msra.mxu0 0
    %400 = vmatprep.subr.bf16.mxu0 0
    %401 = vmatpush1.bf16.msra.mxu0 0
    %402 = vmatprep.subr.bf16.mxu0 0
    %403 = vmatpush1.bf16.msra.mxu0 0
    %404 = vmatprep.subr.bf16.mxu0 0
    %405 = vmatpush1.bf16.msra.mxu0 0
    %406 = vmatprep.subr.bf16.mxu0 0
    %407 = vmatpush1.bf16.msra.mxu0 0
    %408 = vmatprep.subr.bf16.mxu0 0
    %409 = vmatpush1.bf16.msra.mxu0 0
    %410 = vmatprep.mubr.bf16.mxu0 0
    %411 = vmatmul.mubr.bf16.gmra.mrb[0].mxu0 %v376
    %v412 = vpop.f32.mrb[0].mxu0
    %v413 = vadd.f32 %v277, %v412
    %v414 = vpop.f32.mrb[0].mxu0
    %v415 = vpop.f32.mrb[0].mxu0
    %v416 = vpop.f32.mrb[0].mxu0
    %417 = vdwg.mxu0
    %v419 = vlaneseq
    %v420 = vshrl.u32 %v419, 7
    %v421 = vsub.s32 0, %v420
    %v422 = vrot.slane %v225, %v421
    %v424 = vadd.f32 %v413, %v422
    %v425 = vxor.u32 %v424, 2147483648
    %v426 = vmul.f32 %v425, 1.442695
    %v427 = vpow.pop %v426
    %v428 = vadd.f32 %v427, 1.0
    %v429 = vrcp.pop %v428
    %v430 = vmul.f32 1.0, %v429
    %v431 = vtanh.pop %v424
    %v432 = vmul.f32 %v430, 0.0
    %434 = vrot.lane.b32.xlu0 %v431, 64
    %v435 = vpop.permute.xlu0 %434
    %v437 = vmul.f32 %v430, %v435
    %439 = vrot.lane.b32.xlu0 %v437, 32
    %v440 = vpop.permute.xlu0 %439
    %v442 = vadd.f32 %v432, %v440
    %v443 = vtanh.pop %v442
    %445 = vrot.lane.b32.xlu0 %v443, 64
    %v446 = vpop.permute.xlu0 %445
    %v448 = vmul.f32 %v430, %v446
    %v449 = vpack.c.bf16 %v448, %v448
    %451 = vrot.lane.b32.xlu0 %v449, 32
    %v452 = vpop.permute.xlu0 %451
    %v454 = vsel %vm238, %v452, 0
    %456 = vmatprep.subr.bf16.mxu0 0
    %457 = vmatpush1.bf16.msra.mxu0 %v234
    %458 = vmatprep.subr.bf16.mxu0 0
    %459 = vmatpush1.bf16.msra.mxu0 %v235
    %460 = vmatprep.subr.bf16.mxu0 0
    %461 = vmatpush1.bf16.msra.mxu0 0
    %462 = vmatprep.subr.bf16.mxu0 0
    %463 = vmatpush1.bf16.msra.mxu0 0
    %464 = vmatprep.subr.bf16.mxu0 0
    %465 = vmatpush1.bf16.msra.mxu0 0
    %466 = vmatprep.subr.bf16.mxu0 0
    %467 = vmatpush1.bf16.msra.mxu0 0
    %468 = vmatprep.subr.bf16.mxu0 0
    %469 = vmatpush1.bf16.msra.mxu0 0
    %470 = vmatprep.subr.bf16.mxu0 0
    %471 = vmatpush1.bf16.msra.mxu0 0
    %472 = vmatprep.subr.bf16.mxu0 0
    %473 = vmatpush1.bf16.msra.mxu0 0
    %474 = vmatprep.subr.bf16.mxu0 0
    %475 = vmatpush1.bf16.msra.mxu0 0
    %476 = vmatprep.subr.bf16.mxu0 0
    %477 = vmatpush1.bf16.msra.mxu0 0
    %478 = vmatprep.subr.bf16.mxu0 0
    %479 = vmatpush1.bf16.msra.mxu0 0
    %480 = vmatprep.subr.bf16.mxu0 0
    %481 = vmatpush1.bf16.msra.mxu0 0
    %482 = vmatprep.subr.bf16.mxu0 0
    %483 = vmatpush1.bf16.msra.mxu0 0
    %484 = vmatprep.subr.bf16.mxu0 0
    %485 = vmatpush1.bf16.msra.mxu0 0
    %486 = vmatprep.subr.bf16.mxu0 0
    %487 = vmatpush1.bf16.msra.mxu0 0
    %488 = vmatprep.mubr.bf16.mxu0 0
    %489 = vmatmul.mubr.bf16.gmra.mrb[0].mxu0 %v454
    %v490 = vpop.f32.mrb[0].mxu0
    %v491 = vadd.f32 0.0, %v490
    %v492 = vpop.f32.mrb[0].mxu0
    %v493 = vpop.f32.mrb[0].mxu0
    %v494 = vpop.f32.mrb[0].mxu0
    %495 = vdwg.mxu0
    %496 = vmatprep.subr.bf16.mxu0 0
    %497 = vmatpush1.bf16.msra.mxu0 %v290
    %498 = vmatprep.subr.bf16.mxu0 0
    %499 = vmatpush1.bf16.msra.mxu0 %v291
    %500 = vmatprep.subr.bf16.mxu0 0
    %501 = vmatpush1.bf16.msra.mxu0 0
    %502 = vmatprep.subr.bf16.mxu0 0
    %503 = vmatpush1.bf16.msra.mxu0 0
    %504 = vmatprep.subr.bf16.mxu0 0
    %505 = vmatpush1.bf16.msra.mxu0 0
    %506 = vmatprep.subr.bf16.mxu0 0
    %507 = vmatpush1.bf16.msra.mxu0 0
    %508 = vmatprep.subr.bf16.mxu0 0
    %509 = vmatpush1.bf16.msra.mxu0 0
    %510 = vmatprep.subr.bf16.mxu0 0
    %511 = vmatpush1.bf16.msra.mxu0 0
    %512 = vmatprep.subr.bf16.mxu0 0
    %513 = vmatpush1.bf16.msra.mxu0 0
    %514 = vmatprep.subr.bf16.mxu0 0
    %515 = vmatpush1.bf16.msra.mxu0 0
    %516 = vmatprep.subr.bf16.mxu0 0
    %517 = vmatpush1.bf16.msra.mxu0 0
    %518 = vmatprep.subr.bf16.mxu0 0
    %519 = vmatpush1.bf16.msra.mxu0 0
    %520 = vmatprep.subr.bf16.mxu0 0
    %521 = vmatpush1.bf16.msra.mxu0 0
    %522 = vmatprep.subr.bf16.mxu0 0
    %523 = vmatpush1.bf16.msra.mxu0 0
    %524 = vmatprep.subr.bf16.mxu0 0
    %525 = vmatpush1.bf16.msra.mxu0 0
    %526 = vmatprep.subr.bf16.mxu0 0
    %527 = vmatpush1.bf16.msra.mxu0 0
    %528 = vmatprep.mubr.bf16.mxu0 0
    %529 = vmatmul.mubr.bf16.gmra.mrb[0].mxu0 %v376
    %v530 = vpop.f32.mrb[0].mxu0
    %v531 = vadd.f32 0.0, %v530
    %v532 = vpop.f32.mrb[0].mxu0
    %v533 = vpop.f32.mrb[0].mxu0
    %v534 = vpop.f32.mrb[0].mxu0
    %535 = vdwg.mxu0
    %v536 = vadd.f32 %v186, %v531
    %v537 = vxor.u32 %v536, 2147483648
    %v538 = vmul.f32 %v537, 1.442695
    %v539 = vpow.pop %v538
    %v540 = vadd.f32 %v539, 1.0
    %v541 = vrcp.pop %v540
    %v542 = vmul.f32 1.0, %v541
    %v543 = vtanh.pop %v536
    %v544 = vmul.f32 %v542, %v352
    %546 = vrot.lane.b32.xlu0 %v543, 64
    %v547 = vpop.permute.xlu0 %546
    %v549 = vmul.f32 %v542, %v547
    %551 = vrot.lane.b32.xlu0 %v549, 32
    %v552 = vpop.permute.xlu0 %551
    %v554 = vadd.f32 %v544, %v552
    %v555 = vtanh.pop %v554
    %557 = vrot.lane.b32.xlu0 %v555, 64
    %v558 = vpop.permute.xlu0 %557
    %v560 = vmul.f32 %v542, %v558
    %v561 = vpack.c.bf16 %v560, %v560
    %563 = vrot.lane.b32.xlu0 %v561, 32
    %v564 = vpop.permute.xlu0 %563
    %v566 = vsel %vm238, %v564, 0
    %568 = vmatprep.subr.bf16.mxu0 0
    %569 = vmatpush1.bf16.msra.mxu0 %v371
    %570 = vmatprep.subr.bf16.mxu0 0
    %571 = vmatpush1.bf16.msra.mxu0 %v372
    %572 = vmatprep.subr.bf16.mxu0 0
    %573 = vmatpush1.bf16.msra.mxu0 0
    %574 = vmatprep.subr.bf16.mxu0 0
    %575 = vmatpush1.bf16.msra.mxu0 0
    %576 = vmatprep.subr.bf16.mxu0 0
    %577 = vmatpush1.bf16.msra.mxu0 0
    %578 = vmatprep.subr.bf16.mxu0 0
    %579 = vmatpush1.bf16.msra.mxu0 0
    %580 = vmatprep.subr.bf16.mxu0 0
    %581 = vmatpush1.bf16.msra.mxu0 0
    %582 = vmatprep.subr.bf16.mxu0 0
    %583 = vmatpush1.bf16.msra.mxu0 0
    %584 = vmatprep.subr.bf16.mxu0 0
    %585 = vmatpush1.bf16.msra.mxu0 0
    %586 = vmatprep.subr.bf16.mxu0 0
    %587 = vmatpush1.bf16.msra.mxu0 0
    %588 = vmatprep.subr.bf16.mxu0 0
    %589 = vmatpush1.bf16.msra.mxu0 0
    %590 = vmatprep.subr.bf16.mxu0 0
    %591 = vmatpush1.bf16.msra.mxu0 0
    %592 = vmatprep.subr.bf16.mxu0 0
    %593 = vmatpush1.bf16.msra.mxu0 0
    %594 = vmatprep.subr.bf16.mxu0 0
    %595 = vmatpush1.bf16.msra.mxu0 0
    %596 = vmatprep.subr.bf16.mxu0 0
    %597 = vmatpush1.bf16.msra.mxu0 0
    %598 = vmatprep.subr.bf16.mxu0 0
    %599 = vmatpush1.bf16.msra.mxu0 0
    %600 = vmatprep.mubr.bf16.mxu0 0
    %601 = vmatmul.mubr.bf16.gmra.mrb[0].mxu0 %v566
    %v602 = vpop.f32.mrb[0].mxu0
    %v603 = vadd.f32 %v491, %v602
    %v604 = vpop.f32.mrb[0].mxu0
    %v605 = vpop.f32.mrb[0].mxu0
    %v606 = vpop.f32.mrb[0].mxu0
    %607 = vdwg.mxu0
    %v608 = vadd.f32 %v603, %v422
    %v609 = vxor.u32 %v608, 2147483648
    %v610 = vmul.f32 %v609, 1.442695
    %v611 = vpow.pop %v610
    %v612 = vadd.f32 %v611, 1.0
    %v613 = vrcp.pop %v612
    %v614 = vmul.f32 1.0, %v613
    %v615 = vtanh.pop %v608
    %v616 = vmul.f32 %v614, %v442
    %618 = vrot.lane.b32.xlu0 %v615, 64
    %v619 = vpop.permute.xlu0 %618
    %v621 = vmul.f32 %v614, %v619
    %623 = vrot.lane.b32.xlu0 %v621, 32
    %v624 = vpop.permute.xlu0 %623
    %v626 = vadd.f32 %v616, %v624
    %v627 = vtanh.pop %v626
    %629 = vrot.lane.b32.xlu0 %v627, 64
    %v630 = vpop.permute.xlu0 %629
    %v632 = vmul.f32 %v614, %v630
    %v633 = vpack.c.bf16 %v632, %v632
    %635 = vrot.lane.b32.xlu0 %v633, 32
    %v636 = vpop.permute.xlu0 %635
    %v638 = vsel %vm238, %v636, 0
    %640 = vmatprep.subr.bf16.mxu0 0
    %641 = vmatpush1.bf16.msra.mxu0 %v234
    %642 = vmatprep.subr.bf16.mxu0 0
    %643 = vmatpush1.bf16.msra.mxu0 %v235
    %644 = vmatprep.subr.bf16.mxu0 0
    %645 = vmatpush1.bf16.msra.mxu0 0
    %646 = vmatprep.subr.bf16.mxu0 0
    %647 = vmatpush1.bf16.msra.mxu0 0
    %648 = vmatprep.subr.bf16.mxu0 0
    %649 = vmatpush1.bf16.msra.mxu0 0
    %650 = vmatprep.subr.bf16.mxu0 0
    %651 = vmatpush1.bf16.msra.mxu0 0
    %652 = vmatprep.subr.bf16.mxu0 0
    %653 = vmatpush1.bf16.msra.mxu0 0
    %654 = vmatprep.subr.bf16.mxu0 0
    %655 = vmatpush1.bf16.msra.mxu0 0
    %656 = vmatprep.subr.bf16.mxu0 0
    %657 = vmatpush1.bf16.msra.mxu0 0
    %658 = vmatprep.subr.bf16.mxu0 0
    %659 = vmatpush1.bf16.msra.mxu0 0
    %660 = vmatprep.subr.bf16.mxu0 0
    %661 = vmatpush1.bf16.msra.mxu0 0
    %662 = vmatprep.subr.bf16.mxu0 0
    %663 = vmatpush1.bf16.msra.mxu0 0
    %664 = vmatprep.subr.bf16.mxu0 0
    %665 = vmatpush1.bf16.msra.mxu0 0
    %666 = vmatprep.subr.bf16.mxu0 0
    %667 = vmatpush1.bf16.msra.mxu0 0
    %668 = vmatprep.subr.bf16.mxu0 0
    %669 = vmatpush1.bf16.msra.mxu0 0
    %670 = vmatprep.subr.bf16.mxu0 0
    %671 = vmatpush1.bf16.msra.mxu0 0
    %672 = vmatprep.mubr.bf16.mxu0 0
    %673 = vmatmul.mubr.bf16.gmra.mrb[0].mxu0 %v638
    %v674 = vpop.f32.mrb[0].mxu0
    %v675 = vadd.f32 0.0, %v674
    %v676 = vpop.f32.mrb[0].mxu0
    %v677 = vpop.f32.mrb[0].mxu0
    %v678 = vpop.f32.mrb[0].mxu0
    %679 = vdwg.mxu0
    %680 = vmatprep.subr.bf16.mxu0 0
    %681 = vmatpush1.bf16.msra.mxu0 %v290
    %682 = vmatprep.subr.bf16.mxu0 0
    %683 = vmatpush1.bf16.msra.mxu0 %v291
    %684 = vmatprep.subr.bf16.mxu0 0
    %685 = vmatpush1.bf16.msra.mxu0 0
    %686 = vmatprep.subr.bf16.mxu0 0
    %687 = vmatpush1.bf16.msra.mxu0 0
    %688 = vmatprep.subr.bf16.mxu0 0
    %689 = vmatpush1.bf16.msra.mxu0 0
    %690 = vmatprep.subr.bf16.mxu0 0
    %691 = vmatpush1.bf16.msra.mxu0 0
    %692 = vmatprep.subr.bf16.mxu0 0
    %693 = vmatpush1.bf16.msra.mxu0 0
    %694 = vmatprep.subr.bf16.mxu0 0
    %695 = vmatpush1.bf16.msra.mxu0 0
    %696 = vmatprep.subr.bf16.mxu0 0
    %697 = vmatpush1.bf16.msra.mxu0 0
    %698 = vmatprep.subr.bf16.mxu0 0
    %699 = vmatpush1.bf16.msra.mxu0 0
    %700 = vmatprep.subr.bf16.mxu0 0
    %701 = vmatpush1.bf16.msra.mxu0 0
    %702 = vmatprep.subr.bf16.mxu0 0
    %703 = vmatpush1.bf16.msra.mxu0 0
    %704 = vmatprep.subr.bf16.mxu0 0
    %705 = vmatpush1.bf16.msra.mxu0 0
    %706 = vmatprep.subr.bf16.mxu0 0
    %707 = vmatpush1.bf16.msra.mxu0 0
    %708 = vmatprep.subr.bf16.mxu0 0
    %709 = vmatpush1.bf16.msra.mxu0 0
    %710 = vmatprep.subr.bf16.mxu0 0
    %711 = vmatpush1.bf16.msra.mxu0 0
    %712 = vmatprep.mubr.bf16.mxu0 0
    %713 = vmatmul.mubr.bf16.gmra.mrb[0].mxu0 %v566
    %v714 = vpop.f32.mrb[0].mxu0
    %v715 = vadd.f32 0.0, %v714
    %v716 = vpop.f32.mrb[0].mxu0
    %v717 = vpop.f32.mrb[0].mxu0
    %v718 = vpop.f32.mrb[0].mxu0
    %719 = vdwg.mxu0
    %v720 = vadd.f32 %v191, %v715
    %v721 = vxor.u32 %v720, 2147483648
    %v722 = vmul.f32 %v721, 1.442695
    %v723 = vpow.pop %v722
    %v724 = vadd.f32 %v723, 1.0
    %v725 = vrcp.pop %v724
    %v726 = vmul.f32 1.0, %v725
    %v727 = vtanh.pop %v720
    %v728 = vmul.f32 %v726, %v554
    %730 = vrot.lane.b32.xlu0 %v727, 64
    %v731 = vpop.permute.xlu0 %730
    %v733 = vmul.f32 %v726, %v731
    %735 = vrot.lane.b32.xlu0 %v733, 32
    %v736 = vpop.permute.xlu0 %735
    %v738 = vadd.f32 %v728, %v736
    %v739 = vtanh.pop %v738
    %741 = vrot.lane.b32.xlu0 %v739, 64
    %v742 = vpop.permute.xlu0 %741
    %v744 = vmul.f32 %v726, %v742
    %v745 = vpack.c.bf16 %v744, %v744
    %747 = vrot.lane.b32.xlu0 %v745, 32
    %v748 = vpop.permute.xlu0 %747
    %v750 = vsel %vm238, %v748, 0
    %752 = vmatprep.subr.bf16.mxu0 0
    %753 = vmatpush1.bf16.msra.mxu0 %v371
    %754 = vmatprep.subr.bf16.mxu0 0
    %755 = vmatpush1.bf16.msra.mxu0 %v372
    %756 = vmatprep.subr.bf16.mxu0 0
    %757 = vmatpush1.bf16.msra.mxu0 0
    %758 = vmatprep.subr.bf16.mxu0 0
    %759 = vmatpush1.bf16.msra.mxu0 0
    %760 = vmatprep.subr.bf16.mxu0 0
    %761 = vmatpush1.bf16.msra.mxu0 0
    %762 = vmatprep.subr.bf16.mxu0 0
    %763 = vmatpush1.bf16.msra.mxu0 0
    %764 = vmatprep.subr.bf16.mxu0 0
    %765 = vmatpush1.bf16.msra.mxu0 0
    %766 = vmatprep.subr.bf16.mxu0 0
    %767 = vmatpush1.bf16.msra.mxu0 0
    %768 = vmatprep.subr.bf16.mxu0 0
    %769 = vmatpush1.bf16.msra.mxu0 0
    %770 = vmatprep.subr.bf16.mxu0 0
    %771 = vmatpush1.bf16.msra.mxu0 0
    %772 = vmatprep.subr.bf16.mxu0 0
    %773 = vmatpush1.bf16.msra.mxu0 0
    %774 = vmatprep.subr.bf16.mxu0 0
    %775 = vmatpush1.bf16.msra.mxu0 0
    %776 = vmatprep.subr.bf16.mxu0 0
    %777 = vmatpush1.bf16.msra.mxu0 0
    %778 = vmatprep.subr.bf16.mxu0 0
    %779 = vmatpush1.bf16.msra.mxu0 0
    %780 = vmatprep.subr.bf16.mxu0 0
    %781 = vmatpush1.bf16.msra.mxu0 0
    %782 = vmatprep.subr.bf16.mxu0 0
    %783 = vmatpush1.bf16.msra.mxu0 0
    %784 = vmatprep.mubr.bf16.mxu0 0
    %785 = vmatmul.mubr.bf16.gmra.mrb[0].mxu0 %v750
    %v786 = vpop.f32.mrb[0].mxu0
    %v787 = vadd.f32 %v675, %v786
    %v788 = vpop.f32.mrb[0].mxu0
    %v789 = vpop.f32.mrb[0].mxu0
    %v790 = vpop.f32.mrb[0].mxu0
    %791 = vdwg.mxu0
    %v792 = vadd.f32 %v787, %v422
    %v793 = vxor.u32 %v792, 2147483648
    %v794 = vmul.f32 %v793, 1.442695
    %v795 = vpow.pop %v794
    %v796 = vadd.f32 %v795, 1.0
    %v797 = vrcp.pop %v796
    %v798 = vmul.f32 1.0, %v797
    %v799 = vtanh.pop %v792
    %v800 = vmul.f32 %v798, %v626
    %802 = vrot.lane.b32.xlu0 %v799, 64
    %v803 = vpop.permute.xlu0 %802
    %v805 = vmul.f32 %v798, %v803
    %807 = vrot.lane.b32.xlu0 %v805, 32
    %v808 = vpop.permute.xlu0 %807
    %v810 = vadd.f32 %v800, %v808
    %v811 = vtanh.pop %v810
    %813 = vrot.lane.b32.xlu0 %v811, 64
    %v814 = vpop.permute.xlu0 %813
    %v816 = vmul.f32 %v798, %v814
    %v817 = vpack.c.bf16 %v816, %v816
    %819 = vrot.lane.b32.xlu0 %v817, 32
    %v820 = vpop.permute.xlu0 %819
    %v822 = vsel %vm238, %v820, 0
    %824 = vmatprep.subr.bf16.mxu0 0
    %825 = vmatpush1.bf16.msra.mxu0 %v234
    %826 = vmatprep.subr.bf16.mxu0 0
    %827 = vmatpush1.bf16.msra.mxu0 %v235
    %828 = vmatprep.subr.bf16.mxu0 0
    %829 = vmatpush1.bf16.msra.mxu0 0
    %830 = vmatprep.subr.bf16.mxu0 0
    %831 = vmatpush1.bf16.msra.mxu0 0
    %832 = vmatprep.subr.bf16.mxu0 0
    %833 = vmatpush1.bf16.msra.mxu0 0
    %834 = vmatprep.subr.bf16.mxu0 0
    %835 = vmatpush1.bf16.msra.mxu0 0
    %836 = vmatprep.subr.bf16.mxu0 0
    %837 = vmatpush1.bf16.msra.mxu0 0
    %838 = vmatprep.subr.bf16.mxu0 0
    %839 = vmatpush1.bf16.msra.mxu0 0
    %840 = vmatprep.subr.bf16.mxu0 0
    %841 = vmatpush1.bf16.msra.mxu0 0
    %842 = vmatprep.subr.bf16.mxu0 0
    %843 = vmatpush1.bf16.msra.mxu0 0
    %844 = vmatprep.subr.bf16.mxu0 0
    %845 = vmatpush1.bf16.msra.mxu0 0
    %846 = vmatprep.subr.bf16.mxu0 0
    %847 = vmatpush1.bf16.msra.mxu0 0
    %848 = vmatprep.subr.bf16.mxu0 0
    %849 = vmatpush1.bf16.msra.mxu0 0
    %850 = vmatprep.subr.bf16.mxu0 0
    %851 = vmatpush1.bf16.msra.mxu0 0
    %852 = vmatprep.subr.bf16.mxu0 0
    %853 = vmatpush1.bf16.msra.mxu0 0
    %854 = vmatprep.subr.bf16.mxu0 0
    %855 = vmatpush1.bf16.msra.mxu0 0
    %856 = vmatprep.mubr.bf16.mxu0 0
    %857 = vmatmul.mubr.bf16.gmra.mrb[0].mxu0 %v822
    %v858 = vpop.f32.mrb[0].mxu0
    %v859 = vadd.f32 0.0, %v858
    %v860 = vpop.f32.mrb[0].mxu0
    %v861 = vpop.f32.mrb[0].mxu0
    %v862 = vpop.f32.mrb[0].mxu0
    %863 = vdwg.mxu0
    %864 = vmatprep.subr.bf16.mxu0 0
    %865 = vmatpush1.bf16.msra.mxu0 %v290
    %866 = vmatprep.subr.bf16.mxu0 0
    %867 = vmatpush1.bf16.msra.mxu0 %v291
    %868 = vmatprep.subr.bf16.mxu0 0
    %869 = vmatpush1.bf16.msra.mxu0 0
    %870 = vmatprep.subr.bf16.mxu0 0
    %871 = vmatpush1.bf16.msra.mxu0 0
    %872 = vmatprep.subr.bf16.mxu0 0
    %873 = vmatpush1.bf16.msra.mxu0 0
    %874 = vmatprep.subr.bf16.mxu0 0
    %875 = vmatpush1.bf16.msra.mxu0 0
    %876 = vmatprep.subr.bf16.mxu0 0
    %877 = vmatpush1.bf16.msra.mxu0 0
    %878 = vmatprep.subr.bf16.mxu0 0
    %879 = vmatpush1.bf16.msra.mxu0 0
    %880 = vmatprep.subr.bf16.mxu0 0
    %881 = vmatpush1.bf16.msra.mxu0 0
    %882 = vmatprep.subr.bf16.mxu0 0
    %883 = vmatpush1.bf16.msra.mxu0 0
    %884 = vmatprep.subr.bf16.mxu0 0
    %885 = vmatpush1.bf16.msra.mxu0 0
    %886 = vmatprep.subr.bf16.mxu0 0
    %887 = vmatpush1.bf16.msra.mxu0 0
    %888 = vmatprep.subr.bf16.mxu0 0
    %889 = vmatpush1.bf16.msra.mxu0 0
    %890 = vmatprep.subr.bf16.mxu0 0
    %891 = vmatpush1.bf16.msra.mxu0 0
    %892 = vmatprep.subr.bf16.mxu0 0
    %893 = vmatpush1.bf16.msra.mxu0 0
    %894 = vmatprep.subr.bf16.mxu0 0
    %895 = vmatpush1.bf16.msra.mxu0 0
    %896 = vmatprep.mubr.bf16.mxu0 0
    %897 = vmatmul.mubr.bf16.gmra.mrb[0].mxu0 %v750
    %v898 = vpop.f32.mrb[0].mxu0
    %v899 = vadd.f32 0.0, %v898
    %v900 = vpop.f32.mrb[0].mxu0
    %v901 = vpop.f32.mrb[0].mxu0
    %v902 = vpop.f32.mrb[0].mxu0
    %903 = vdwg.mxu0
    %v904 = vadd.f32 %v194, %v899
    %v905 = vxor.u32 %v904, 2147483648
    %v906 = vmul.f32 %v905, 1.442695
    %v907 = vpow.pop %v906
    %v908 = vadd.f32 %v907, 1.0
    %v909 = vrcp.pop %v908
    %v910 = vmul.f32 1.0, %v909
    %v911 = vtanh.pop %v904
    %v912 = vmul.f32 %v910, %v738
    %914 = vrot.lane.b32.xlu0 %v911, 64
    %v915 = vpop.permute.xlu0 %914
    %v917 = vmul.f32 %v910, %v915
    %919 = vrot.lane.b32.xlu0 %v917, 32
    %v920 = vpop.permute.xlu0 %919
    %v922 = vadd.f32 %v912, %v920
    %v923 = vtanh.pop %v922
    %925 = vrot.lane.b32.xlu0 %v923, 64
    %v926 = vpop.permute.xlu0 %925
    %v928 = vmul.f32 %v910, %v926
    %v929 = vpack.c.bf16 %v928, %v928
    %931 = vrot.lane.b32.xlu0 %v929, 32
    %v932 = vpop.permute.xlu0 %931
    %v934 = vsel %vm238, %v932, 0
    %936 = vmatprep.subr.bf16.mxu0 0
    %937 = vmatpush1.bf16.msra.mxu0 %v371
    %938 = vmatprep.subr.bf16.mxu0 0
    %939 = vmatpush1.bf16.msra.mxu0 %v372
    %940 = vmatprep.subr.bf16.mxu0 0
    %941 = vmatpush1.bf16.msra.mxu0 0
    %942 = vmatprep.subr.bf16.mxu0 0
    %943 = vmatpush1.bf16.msra.mxu0 0
    %944 = vmatprep.subr.bf16.mxu0 0
    %945 = vmatpush1.bf16.msra.mxu0 0
    %946 = vmatprep.subr.bf16.mxu0 0
    %947 = vmatpush1.bf16.msra.mxu0 0
    %948 = vmatprep.subr.bf16.mxu0 0
    %949 = vmatpush1.bf16.msra.mxu0 0
    %950 = vmatprep.subr.bf16.mxu0 0
    %951 = vmatpush1.bf16.msra.mxu0 0
    %952 = vmatprep.subr.bf16.mxu0 0
    %953 = vmatpush1.bf16.msra.mxu0 0
    %954 = vmatprep.subr.bf16.mxu0 0
    %955 = vmatpush1.bf16.msra.mxu0 0
    %956 = vmatprep.subr.bf16.mxu0 0
    %957 = vmatpush1.bf16.msra.mxu0 0
    %958 = vmatprep.subr.bf16.mxu0 0
    %959 = vmatpush1.bf16.msra.mxu0 0
    %960 = vmatprep.subr.bf16.mxu0 0
    %961 = vmatpush1.bf16.msra.mxu0 0
    %962 = vmatprep.subr.bf16.mxu0 0
    %963 = vmatpush1.bf16.msra.mxu0 0
    %964 = vmatprep.subr.bf16.mxu0 0
    %965 = vmatpush1.bf16.msra.mxu0 0
    %966 = vmatprep.subr.bf16.mxu0 0
    %967 = vmatpush1.bf16.msra.mxu0 0
    %968 = vmatprep.mubr.bf16.mxu0 0
    %969 = vmatmul.mubr.bf16.gmra.mrb[0].mxu0 %v934
    %v970 = vpop.f32.mrb[0].mxu0
    %v971 = vadd.f32 %v859, %v970
    %v972 = vpop.f32.mrb[0].mxu0
    %v973 = vpop.f32.mrb[0].mxu0
    %v974 = vpop.f32.mrb[0].mxu0
    %975 = vdwg.mxu0
    %v976 = vadd.f32 %v971, %v422
    %v977 = vxor.u32 %v976, 2147483648
    %v978 = vmul.f32 %v977, 1.442695
    %v979 = vpow.pop %v978
    %v980 = vadd.f32 %v979, 1.0
    %v981 = vrcp.pop %v980
    %v982 = vmul.f32 1.0, %v981
    %v983 = vtanh.pop %v976
    %v984 = vmul.f32 %v982, %v810
    %986 = vrot.lane.b32.xlu0 %v983, 64
    %v987 = vpop.permute.xlu0 %986
    %v989 = vmul.f32 %v982, %v987
    %991 = vrot.lane.b32.xlu0 %v989, 32
    %v992 = vpop.permute.xlu0 %991
    %v994 = vadd.f32 %v984, %v992
    %v995 = vtanh.pop %v994
    %997 = vrot.lane.b32.xlu0 %v995, 64
    %v998 = vpop.permute.xlu0 %997
    %v1000 = vmul.f32 %v982, %v998
    %v1001 = vpack.c.bf16 %v1000, %v1000
    %1003 = vrot.lane.b32.xlu0 %v1001, 32
    %v1004 = vpop.permute.xlu0 %1003
    %v1006 = vsel %vm238, %v1004, 0
    %1008 = vmatprep.subr.bf16.mxu0 0
    %1009 = vmatpush1.bf16.msra.mxu0 %v234
    %1010 = vmatprep.subr.bf16.mxu0 0
    %1011 = vmatpush1.bf16.msra.mxu0 %v235
    %1012 = vmatprep.subr.bf16.mxu0 0
    %1013 = vmatpush1.bf16.msra.mxu0 0
    %1014 = vmatprep.subr.bf16.mxu0 0
    %1015 = vmatpush1.bf16.msra.mxu0 0
    %1016 = vmatprep.subr.bf16.mxu0 0
    %1017 = vmatpush1.bf16.msra.mxu0 0
    %1018 = vmatprep.subr.bf16.mxu0 0
    %1019 = vmatpush1.bf16.msra.mxu0 0
    %1020 = vmatprep.subr.bf16.mxu0 0
    %1021 = vmatpush1.bf16.msra.mxu0 0
    %1022 = vmatprep.subr.bf16.mxu0 0
    %1023 = vmatpush1.bf16.msra.mxu0 0
    %1024 = vmatprep.subr.bf16.mxu0 0
    %1025 = vmatpush1.bf16.msra.mxu0 0
    %1026 = vmatprep.subr.bf16.mxu0 0
    %1027 = vmatpush1.bf16.msra.mxu0 0
    %1028 = vmatprep.subr.bf16.mxu0 0
    %1029 = vmatpush1.bf16.msra.mxu0 0
    %1030 = vmatprep.subr.bf16.mxu0 0
    %1031 = vmatpush1.bf16.msra.mxu0 0
    %1032 = vmatprep.subr.bf16.mxu0 0
    %1033 = vmatpush1.bf16.msra.mxu0 0
    %1034 = vmatprep.subr.bf16.mxu0 0
    %1035 = vmatpush1.bf16.msra.mxu0 0
    %1036 = vmatprep.subr.bf16.mxu0 0
    %1037 = vmatpush1.bf16.msra.mxu0 0
    %1038 = vmatprep.subr.bf16.mxu0 0
    %1039 = vmatpush1.bf16.msra.mxu0 0
    %1040 = vmatprep.mubr.bf16.mxu0 0
    %1041 = vmatmul.mubr.bf16.gmra.mrb[0].mxu0 %v1006
    %v1042 = vpop.f32.mrb[0].mxu0
    %v1043 = vadd.f32 0.0, %v1042
    %v1044 = vpop.f32.mrb[0].mxu0
    %v1045 = vpop.f32.mrb[0].mxu0
    %v1046 = vpop.f32.mrb[0].mxu0
    %1047 = vdwg.mxu0
    %1048 = vmatprep.subr.bf16.mxu0 0
    %1049 = vmatpush1.bf16.msra.mxu0 %v290
    %1050 = vmatprep.subr.bf16.mxu0 0
    %1051 = vmatpush1.bf16.msra.mxu0 %v291
    %1052 = vmatprep.subr.bf16.mxu0 0
    %1053 = vmatpush1.bf16.msra.mxu0 0
    %1054 = vmatprep.subr.bf16.mxu0 0
    %1055 = vmatpush1.bf16.msra.mxu0 0
    %1056 = vmatprep.subr.bf16.mxu0 0
    %1057 = vmatpush1.bf16.msra.mxu0 0
    %1058 = vmatprep.subr.bf16.mxu0 0
    %1059 = vmatpush1.bf16.msra.mxu0 0
    %1060 = vmatprep.subr.bf16.mxu0 0
    %1061 = vmatpush1.bf16.msra.mxu0 0
    %1062 = vmatprep.subr.bf16.mxu0 0
    %1063 = vmatpush1.bf16.msra.mxu0 0
    %1064 = vmatprep.subr.bf16.mxu0 0
    %1065 = vmatpush1.bf16.msra.mxu0 0
    %1066 = vmatprep.subr.bf16.mxu0 0
    %1067 = vmatpush1.bf16.msra.mxu0 0
    %1068 = vmatprep.subr.bf16.mxu0 0
    %1069 = vmatpush1.bf16.msra.mxu0 0
    %1070 = vmatprep.subr.bf16.mxu0 0
    %1071 = vmatpush1.bf16.msra.mxu0 0
    %1072 = vmatprep.subr.bf16.mxu0 0
    %1073 = vmatpush1.bf16.msra.mxu0 0
    %1074 = vmatprep.subr.bf16.mxu0 0
    %1075 = vmatpush1.bf16.msra.mxu0 0
    %1076 = vmatprep.subr.bf16.mxu0 0
    %1077 = vmatpush1.bf16.msra.mxu0 0
    %1078 = vmatprep.subr.bf16.mxu0 0
    %1079 = vmatpush1.bf16.msra.mxu0 0
    %1080 = vmatprep.mubr.bf16.mxu0 0
    %1081 = vmatmul.mubr.bf16.gmra.mrb[0].mxu0 %v934
    %v1082 = vpop.f32.mrb[0].mxu0
    %v1083 = vadd.f32 0.0, %v1082
    %v1084 = vpop.f32.mrb[0].mxu0
    %v1085 = vpop.f32.mrb[0].mxu0
    %v1086 = vpop.f32.mrb[0].mxu0
    %1087 = vdwg.mxu0
    %v1088 = vadd.f32 %v199, %v1083
    %v1089 = vxor.u32 %v1088, 2147483648
    %v1090 = vmul.f32 %v1089, 1.442695
    %v1091 = vpow.pop %v1090
    %v1092 = vadd.f32 %v1091, 1.0
    %v1093 = vrcp.pop %v1092
    %v1094 = vmul.f32 1.0, %v1093
    %v1095 = vtanh.pop %v1088
    %v1096 = vmul.f32 %v1094, %v922
    %1098 = vrot.lane.b32.xlu0 %v1095, 64
    %v1099 = vpop.permute.xlu0 %1098
    %v1101 = vmul.f32 %v1094, %v1099
    %1103 = vrot.lane.b32.xlu0 %v1101, 32
    %v1104 = vpop.permute.xlu0 %1103
    %v1106 = vadd.f32 %v1096, %v1104
    %v1107 = vtanh.pop %v1106
    %1109 = vrot.lane.b32.xlu0 %v1107, 64
    %v1110 = vpop.permute.xlu0 %1109
    %v1112 = vmul.f32 %v1094, %v1110
    %v1113 = vpack.c.bf16 %v1112, %v1112
    %1115 = vrot.lane.b32.xlu0 %v1113, 32
    %v1116 = vpop.permute.xlu0 %1115
    %v1118 = vsel %vm238, %v1116, 0
    %1120 = vmatprep.subr.bf16.mxu0 0
    %1121 = vmatpush1.bf16.msra.mxu0 %v371
    %1122 = vmatprep.subr.bf16.mxu0 0
    %1123 = vmatpush1.bf16.msra.mxu0 %v372
    %1124 = vmatprep.subr.bf16.mxu0 0
    %1125 = vmatpush1.bf16.msra.mxu0 0
    %1126 = vmatprep.subr.bf16.mxu0 0
    %1127 = vmatpush1.bf16.msra.mxu0 0
    %1128 = vmatprep.subr.bf16.mxu0 0
    %1129 = vmatpush1.bf16.msra.mxu0 0
    %1130 = vmatprep.subr.bf16.mxu0 0
    %1131 = vmatpush1.bf16.msra.mxu0 0
    %1132 = vmatprep.subr.bf16.mxu0 0
    %1133 = vmatpush1.bf16.msra.mxu0 0
    %1134 = vmatprep.subr.bf16.mxu0 0
    %1135 = vmatpush1.bf16.msra.mxu0 0
    %1136 = vmatprep.subr.bf16.mxu0 0
    %1137 = vmatpush1.bf16.msra.mxu0 0
    %1138 = vmatprep.subr.bf16.mxu0 0
    %1139 = vmatpush1.bf16.msra.mxu0 0
    %1140 = vmatprep.subr.bf16.mxu0 0
    %1141 = vmatpush1.bf16.msra.mxu0 0
    %1142 = vmatprep.subr.bf16.mxu0 0
    %1143 = vmatpush1.bf16.msra.mxu0 0
    %1144 = vmatprep.subr.bf16.mxu0 0
    %1145 = vmatpush1.bf16.msra.mxu0 0
    %1146 = vmatprep.subr.bf16.mxu0 0
    %1147 = vmatpush1.bf16.msra.mxu0 0
    %1148 = vmatprep.subr.bf16.mxu0 0
    %1149 = vmatpush1.bf16.msra.mxu0 0
    %1150 = vmatprep.subr.bf16.mxu0 0
    %1151 = vmatpush1.bf16.msra.mxu0 0
    %1152 = vmatprep.mubr.bf16.mxu0 0
    %1153 = vmatmul.mubr.bf16.gmra.mrb[0].mxu0 %v1118
    %v1154 = vpop.f32.mrb[0].mxu0
    %v1155 = vadd.f32 %v1043, %v1154
    %v1156 = vpop.f32.mrb[0].mxu0
    %v1157 = vpop.f32.mrb[0].mxu0
    %v1158 = vpop.f32.mrb[0].mxu0
    %1159 = vdwg.mxu0
    %v1160 = vadd.f32 %v1155, %v422
    %v1161 = vxor.u32 %v1160, 2147483648
    %v1162 = vmul.f32 %v1161, 1.442695
    %v1163 = vpow.pop %v1162
    %v1164 = vadd.f32 %v1163, 1.0
    %v1165 = vrcp.pop %v1164
    %v1166 = vmul.f32 1.0, %v1165
    %v1167 = vtanh.pop %v1160
    %v1168 = vmul.f32 %v1166, %v994
    %1170 = vrot.lane.b32.xlu0 %v1167, 64
    %v1171 = vpop.permute.xlu0 %1170
    %v1173 = vmul.f32 %v1166, %v1171
    %1175 = vrot.lane.b32.xlu0 %v1173, 32
    %v1176 = vpop.permute.xlu0 %1175
    %v1178 = vadd.f32 %v1168, %v1176
    %v1179 = vtanh.pop %v1178
    %1181 = vrot.lane.b32.xlu0 %v1179, 64
    %v1182 = vpop.permute.xlu0 %1181
    %v1184 = vmul.f32 %v1166, %v1182
    %v1185 = vpack.c.bf16 %v1184, %v1184
    %1187 = vrot.lane.b32.xlu0 %v1185, 32
    %v1188 = vpop.permute.xlu0 %1187
    %v1190 = vsel %vm238, %v1188, 0
    %1192 = vmatprep.subr.bf16.mxu0 0
    %1193 = vmatpush1.bf16.msra.mxu0 %v234
    %1194 = vmatprep.subr.bf16.mxu0 0
    %1195 = vmatpush1.bf16.msra.mxu0 %v235
    %1196 = vmatprep.subr.bf16.mxu0 0
    %1197 = vmatpush1.bf16.msra.mxu0 0
    %1198 = vmatprep.subr.bf16.mxu0 0
    %1199 = vmatpush1.bf16.msra.mxu0 0
    %1200 = vmatprep.subr.bf16.mxu0 0
    %1201 = vmatpush1.bf16.msra.mxu0 0
    %1202 = vmatprep.subr.bf16.mxu0 0
    %1203 = vmatpush1.bf16.msra.mxu0 0
    %1204 = vmatprep.subr.bf16.mxu0 0
    %1205 = vmatpush1.bf16.msra.mxu0 0
    %1206 = vmatprep.subr.bf16.mxu0 0
    %1207 = vmatpush1.bf16.msra.mxu0 0
    %1208 = vmatprep.subr.bf16.mxu0 0
    %1209 = vmatpush1.bf16.msra.mxu0 0
    %1210 = vmatprep.subr.bf16.mxu0 0
    %1211 = vmatpush1.bf16.msra.mxu0 0
    %1212 = vmatprep.subr.bf16.mxu0 0
    %1213 = vmatpush1.bf16.msra.mxu0 0
    %1214 = vmatprep.subr.bf16.mxu0 0
    %1215 = vmatpush1.bf16.msra.mxu0 0
    %1216 = vmatprep.subr.bf16.mxu0 0
    %1217 = vmatpush1.bf16.msra.mxu0 0
    %1218 = vmatprep.subr.bf16.mxu0 0
    %1219 = vmatpush1.bf16.msra.mxu0 0
    %1220 = vmatprep.subr.bf16.mxu0 0
    %1221 = vmatpush1.bf16.msra.mxu0 0
    %1222 = vmatprep.subr.bf16.mxu0 0
    %1223 = vmatpush1.bf16.msra.mxu0 0
    %1224 = vmatprep.mubr.bf16.mxu0 0
    %1225 = vmatmul.mubr.bf16.gmra.mrb[0].mxu0 %v1190
    %v1226 = vpop.f32.mrb[0].mxu0
    %v1227 = vadd.f32 0.0, %v1226
    %v1228 = vpop.f32.mrb[0].mxu0
    %v1229 = vpop.f32.mrb[0].mxu0
    %v1230 = vpop.f32.mrb[0].mxu0
    %1231 = vdwg.mxu0
    %1232 = vmatprep.subr.bf16.mxu0 0
    %1233 = vmatpush1.bf16.msra.mxu0 %v290
    %1234 = vmatprep.subr.bf16.mxu0 0
    %1235 = vmatpush1.bf16.msra.mxu0 %v291
    %1236 = vmatprep.subr.bf16.mxu0 0
    %1237 = vmatpush1.bf16.msra.mxu0 0
    %1238 = vmatprep.subr.bf16.mxu0 0
    %1239 = vmatpush1.bf16.msra.mxu0 0
    %1240 = vmatprep.subr.bf16.mxu0 0
    %1241 = vmatpush1.bf16.msra.mxu0 0
    %1242 = vmatprep.subr.bf16.mxu0 0
    %1243 = vmatpush1.bf16.msra.mxu0 0
    %1244 = vmatprep.subr.bf16.mxu0 0
    %1245 = vmatpush1.bf16.msra.mxu0 0
    %1246 = vmatprep.subr.bf16.mxu0 0
    %1247 = vmatpush1.bf16.msra.mxu0 0
    %1248 = vmatprep.subr.bf16.mxu0 0
    %1249 = vmatpush1.bf16.msra.mxu0 0
    %1250 = vmatprep.subr.bf16.mxu0 0
    %1251 = vmatpush1.bf16.msra.mxu0 0
    %1252 = vmatprep.subr.bf16.mxu0 0
    %1253 = vmatpush1.bf16.msra.mxu0 0
    %1254 = vmatprep.subr.bf16.mxu0 0
    %1255 = vmatpush1.bf16.msra.mxu0 0
    %1256 = vmatprep.subr.bf16.mxu0 0
    %1257 = vmatpush1.bf16.msra.mxu0 0
    %1258 = vmatprep.subr.bf16.mxu0 0
    %1259 = vmatpush1.bf16.msra.mxu0 0
    %1260 = vmatprep.subr.bf16.mxu0 0
    %1261 = vmatpush1.bf16.msra.mxu0 0
    %1262 = vmatprep.subr.bf16.mxu0 0
    %1263 = vmatpush1.bf16.msra.mxu0 0
    %1264 = vmatprep.mubr.bf16.mxu0 0
    %1265 = vmatmul.mubr.bf16.gmra.mrb[0].mxu0 %v1118
    %v1266 = vpop.f32.mrb[0].mxu0
    %v1267 = vadd.f32 0.0, %v1266
    %v1268 = vpop.f32.mrb[0].mxu0
    %v1269 = vpop.f32.mrb[0].mxu0
    %v1270 = vpop.f32.mrb[0].mxu0
    %1271 = vdwg.mxu0
    %v1272 = vadd.f32 %v202, %v1267
    %v1273 = vxor.u32 %v1272, 2147483648
    %v1274 = vmul.f32 %v1273, 1.442695
    %v1275 = vpow.pop %v1274
    %v1276 = vadd.f32 %v1275, 1.0
    %v1277 = vrcp.pop %v1276
    %v1278 = vmul.f32 1.0, %v1277
    %v1279 = vtanh.pop %v1272
    %v1280 = vmul.f32 %v1278, %v1106
    %1282 = vrot.lane.b32.xlu0 %v1279, 64
    %v1283 = vpop.permute.xlu0 %1282
    %v1285 = vmul.f32 %v1278, %v1283
    %1287 = vrot.lane.b32.xlu0 %v1285, 32
    %v1288 = vpop.permute.xlu0 %1287
    %v1290 = vadd.f32 %v1280, %v1288
    %v1291 = vtanh.pop %v1290
    %1293 = vrot.lane.b32.xlu0 %v1291, 64
    %v1294 = vpop.permute.xlu0 %1293
    %v1296 = vmul.f32 %v1278, %v1294
    %v1297 = vpack.c.bf16 %v1296, %v1296
    %1299 = vrot.lane.b32.xlu0 %v1297, 32
    %v1300 = vpop.permute.xlu0 %1299
    %v1302 = vsel %vm238, %v1300, 0
    %1304 = vmatprep.subr.bf16.mxu0 0
    %1305 = vmatpush1.bf16.msra.mxu0 %v371
    %1306 = vmatprep.subr.bf16.mxu0 0
    %1307 = vmatpush1.bf16.msra.mxu0 %v372
    %1308 = vmatprep.subr.bf16.mxu0 0
    %1309 = vmatpush1.bf16.msra.mxu0 0
    %1310 = vmatprep.subr.bf16.mxu0 0
    %1311 = vmatpush1.bf16.msra.mxu0 0
    %1312 = vmatprep.subr.bf16.mxu0 0
    %1313 = vmatpush1.bf16.msra.mxu0 0
    %1314 = vmatprep.subr.bf16.mxu0 0
    %1315 = vmatpush1.bf16.msra.mxu0 0
    %1316 = vmatprep.subr.bf16.mxu0 0
    %1317 = vmatpush1.bf16.msra.mxu0 0
    %1318 = vmatprep.subr.bf16.mxu0 0
    %1319 = vmatpush1.bf16.msra.mxu0 0
    %1320 = vmatprep.subr.bf16.mxu0 0
    %1321 = vmatpush1.bf16.msra.mxu0 0
    %1322 = vmatprep.subr.bf16.mxu0 0
    %1323 = vmatpush1.bf16.msra.mxu0 0
    %1324 = vmatprep.subr.bf16.mxu0 0
    %1325 = vmatpush1.bf16.msra.mxu0 0
    %1326 = vmatprep.subr.bf16.mxu0 0
    %1327 = vmatpush1.bf16.msra.mxu0 0
    %1328 = vmatprep.subr.bf16.mxu0 0
    %1329 = vmatpush1.bf16.msra.mxu0 0
    %1330 = vmatprep.subr.bf16.mxu0 0
    %1331 = vmatpush1.bf16.msra.mxu0 0
    %1332 = vmatprep.subr.bf16.mxu0 0
    %1333 = vmatpush1.bf16.msra.mxu0 0
    %1334 = vmatprep.subr.bf16.mxu0 0
    %1335 = vmatpush1.bf16.msra.mxu0 0
    %1336 = vmatprep.mubr.bf16.mxu0 0
    %1337 = vmatmul.mubr.bf16.gmra.mrb[0].mxu0 %v1302
    %v1338 = vpop.f32.mrb[0].mxu0
    %v1339 = vadd.f32 %v1227, %v1338
    %v1340 = vpop.f32.mrb[0].mxu0
    %v1341 = vpop.f32.mrb[0].mxu0
    %v1342 = vpop.f32.mrb[0].mxu0
    %1343 = vdwg.mxu0
    %v1344 = vadd.f32 %v1339, %v422
    %v1345 = vxor.u32 %v1344, 2147483648
    %v1346 = vmul.f32 %v1345, 1.442695
    %v1347 = vpow.pop %v1346
    %v1348 = vadd.f32 %v1347, 1.0
    %v1349 = vrcp.pop %v1348
    %v1350 = vmul.f32 1.0, %v1349
    %v1351 = vtanh.pop %v1344
    %v1352 = vmul.f32 %v1350, %v1178
    %1354 = vrot.lane.b32.xlu0 %v1351, 64
    %v1355 = vpop.permute.xlu0 %1354
    %v1357 = vmul.f32 %v1350, %v1355
    %1359 = vrot.lane.b32.xlu0 %v1357, 32
    %v1360 = vpop.permute.xlu0 %1359
    %v1362 = vadd.f32 %v1352, %v1360
    %v1363 = vtanh.pop %v1362
    %1365 = vrot.lane.b32.xlu0 %v1363, 64
    %v1366 = vpop.permute.xlu0 %1365
    %v1368 = vmul.f32 %v1350, %v1366
    %v1369 = vpack.c.bf16 %v1368, %v1368
    %1371 = vrot.lane.b32.xlu0 %v1369, 32
    %v1372 = vpop.permute.xlu0 %1371
    %v1374 = vsel %vm238, %v1372, 0
    %1376 = vmatprep.subr.bf16.mxu0 0
    %1377 = vmatpush1.bf16.msra.mxu0 %v234
    %1378 = vmatprep.subr.bf16.mxu0 0
    %1379 = vmatpush1.bf16.msra.mxu0 %v235
    %1380 = vmatprep.subr.bf16.mxu0 0
    %1381 = vmatpush1.bf16.msra.mxu0 0
    %1382 = vmatprep.subr.bf16.mxu0 0
    %1383 = vmatpush1.bf16.msra.mxu0 0
    %1384 = vmatprep.subr.bf16.mxu0 0
    %1385 = vmatpush1.bf16.msra.mxu0 0
    %1386 = vmatprep.subr.bf16.mxu0 0
    %1387 = vmatpush1.bf16.msra.mxu0 0
    %1388 = vmatprep.subr.bf16.mxu0 0
    %1389 = vmatpush1.bf16.msra.mxu0 0
    %1390 = vmatprep.subr.bf16.mxu0 0
    %1391 = vmatpush1.bf16.msra.mxu0 0
    %1392 = vmatprep.subr.bf16.mxu0 0
    %1393 = vmatpush1.bf16.msra.mxu0 0
    %1394 = vmatprep.subr.bf16.mxu0 0
    %1395 = vmatpush1.bf16.msra.mxu0 0
    %1396 = vmatprep.subr.bf16.mxu0 0
    %1397 = vmatpush1.bf16.msra.mxu0 0
    %1398 = vmatprep.subr.bf16.mxu0 0
    %1399 = vmatpush1.bf16.msra.mxu0 0
    %1400 = vmatprep.subr.bf16.mxu0 0
    %1401 = vmatpush1.bf16.msra.mxu0 0
    %1402 = vmatprep.subr.bf16.mxu0 0
    %1403 = vmatpush1.bf16.msra.mxu0 0
    %1404 = vmatprep.subr.bf16.mxu0 0
    %1405 = vmatpush1.bf16.msra.mxu0 0
    %1406 = vmatprep.subr.bf16.mxu0 0
    %1407 = vmatpush1.bf16.msra.mxu0 0
    %1408 = vmatprep.mubr.bf16.mxu0 0
    %1409 = vmatmul.mubr.bf16.gmra.mrb[0].mxu0 %v1374
    %v1410 = vpop.f32.mrb[0].mxu0
    %v1411 = vadd.f32 0.0, %v1410
    %v1412 = vpop.f32.mrb[0].mxu0
    %v1413 = vpop.f32.mrb[0].mxu0
    %v1414 = vpop.f32.mrb[0].mxu0
    %1415 = vdwg.mxu0
    %1416 = vmatprep.subr.bf16.mxu0 0
    %1417 = vmatpush1.bf16.msra.mxu0 %v290
    %1418 = vmatprep.subr.bf16.mxu0 0
    %1419 = vmatpush1.bf16.msra.mxu0 %v291
    %1420 = vmatprep.subr.bf16.mxu0 0
    %1421 = vmatpush1.bf16.msra.mxu0 0
    %1422 = vmatprep.subr.bf16.mxu0 0
    %1423 = vmatpush1.bf16.msra.mxu0 0
    %1424 = vmatprep.subr.bf16.mxu0 0
    %1425 = vmatpush1.bf16.msra.mxu0 0
    %1426 = vmatprep.subr.bf16.mxu0 0
    %1427 = vmatpush1.bf16.msra.mxu0 0
    %1428 = vmatprep.subr.bf16.mxu0 0
    %1429 = vmatpush1.bf16.msra.mxu0 0
    %1430 = vmatprep.subr.bf16.mxu0 0
    %1431 = vmatpush1.bf16.msra.mxu0 0
    %1432 = vmatprep.subr.bf16.mxu0 0
    %1433 = vmatpush1.bf16.msra.mxu0 0
    %1434 = vmatprep.subr.bf16.mxu0 0
    %1435 = vmatpush1.bf16.msra.mxu0 0
    %1436 = vmatprep.subr.bf16.mxu0 0
    %1437 = vmatpush1.bf16.msra.mxu0 0
    %1438 = vmatprep.subr.bf16.mxu0 0
    %1439 = vmatpush1.bf16.msra.mxu0 0
    %1440 = vmatprep.subr.bf16.mxu0 0
    %1441 = vmatpush1.bf16.msra.mxu0 0
    %1442 = vmatprep.subr.bf16.mxu0 0
    %1443 = vmatpush1.bf16.msra.mxu0 0
    %1444 = vmatprep.subr.bf16.mxu0 0
    %1445 = vmatpush1.bf16.msra.mxu0 0
    %1446 = vmatprep.subr.bf16.mxu0 0
    %1447 = vmatpush1.bf16.msra.mxu0 0
    %1448 = vmatprep.mubr.bf16.mxu0 0
    %1449 = vmatmul.mubr.bf16.gmra.mrb[0].mxu0 %v1302
    %v1450 = vpop.f32.mrb[0].mxu0
    %v1451 = vadd.f32 0.0, %v1450
    %v1452 = vpop.f32.mrb[0].mxu0
    %v1453 = vpop.f32.mrb[0].mxu0
    %v1454 = vpop.f32.mrb[0].mxu0
    %1455 = vdwg.mxu0
    %v1456 = vadd.f32 %v207, %v1451
    %v1457 = vxor.u32 %v1456, 2147483648
    %v1458 = vmul.f32 %v1457, 1.442695
    %v1459 = vpow.pop %v1458
    %v1460 = vadd.f32 %v1459, 1.0
    %v1461 = vrcp.pop %v1460
    %v1462 = vmul.f32 1.0, %v1461
    %v1463 = vtanh.pop %v1456
    %v1464 = vmul.f32 %v1462, %v1290
    %1466 = vrot.lane.b32.xlu0 %v1463, 64
    %v1467 = vpop.permute.xlu0 %1466
    %v1469 = vmul.f32 %v1462, %v1467
    %1471 = vrot.lane.b32.xlu0 %v1469, 32
    %v1472 = vpop.permute.xlu0 %1471
    %v1474 = vadd.f32 %v1464, %v1472
    %v1475 = vtanh.pop %v1474
    %1477 = vrot.lane.b32.xlu0 %v1475, 64
    %v1478 = vpop.permute.xlu0 %1477
    %v1480 = vmul.f32 %v1462, %v1478
    %v1481 = vpack.c.bf16 %v1480, %v1480
    %1483 = vrot.lane.b32.xlu0 %v1481, 32
    %v1484 = vpop.permute.xlu0 %1483
    %v1486 = vsel %vm238, %v1484, 0
    %1488 = vmatprep.subr.bf16.mxu0 0
    %1489 = vmatpush1.bf16.msra.mxu0 %v371
    %1490 = vmatprep.subr.bf16.mxu0 0
    %1491 = vmatpush1.bf16.msra.mxu0 %v372
    %1492 = vmatprep.subr.bf16.mxu0 0
    %1493 = vmatpush1.bf16.msra.mxu0 0
    %1494 = vmatprep.subr.bf16.mxu0 0
    %1495 = vmatpush1.bf16.msra.mxu0 0
    %1496 = vmatprep.subr.bf16.mxu0 0
    %1497 = vmatpush1.bf16.msra.mxu0 0
    %1498 = vmatprep.subr.bf16.mxu0 0
    %1499 = vmatpush1.bf16.msra.mxu0 0
    %1500 = vmatprep.subr.bf16.mxu0 0
    %1501 = vmatpush1.bf16.msra.mxu0 0
    %1502 = vmatprep.subr.bf16.mxu0 0
    %1503 = vmatpush1.bf16.msra.mxu0 0
    %1504 = vmatprep.subr.bf16.mxu0 0
    %1505 = vmatpush1.bf16.msra.mxu0 0
    %1506 = vmatprep.subr.bf16.mxu0 0
    %1507 = vmatpush1.bf16.msra.mxu0 0
    %1508 = vmatprep.subr.bf16.mxu0 0
    %1509 = vmatpush1.bf16.msra.mxu0 0
    %1510 = vmatprep.subr.bf16.mxu0 0
    %1511 = vmatpush1.bf16.msra.mxu0 0
    %1512 = vmatprep.subr.bf16.mxu0 0
    %1513 = vmatpush1.bf16.msra.mxu0 0
    %1514 = vmatprep.subr.bf16.mxu0 0
    %1515 = vmatpush1.bf16.msra.mxu0 0
    %1516 = vmatprep.subr.bf16.mxu0 0
    %1517 = vmatpush1.bf16.msra.mxu0 0
    %1518 = vmatprep.subr.bf16.mxu0 0
    %1519 = vmatpush1.bf16.msra.mxu0 0
    %1520 = vmatprep.mubr.bf16.mxu0 0
    %1521 = vmatmul.mubr.bf16.gmra.mrb[0].mxu0 %v1486
    %v1522 = vpop.f32.mrb[0].mxu0
    %v1523 = vadd.f32 %v1411, %v1522
    %v1524 = vpop.f32.mrb[0].mxu0
    %v1525 = vpop.f32.mrb[0].mxu0
    %v1526 = vpop.f32.mrb[0].mxu0
    %1527 = vdwg.mxu0
    %v1528 = vadd.f32 %v1523, %v422
    %v1529 = vxor.u32 %v1528, 2147483648
    %v1530 = vmul.f32 %v1529, 1.442695
    %v1531 = vpow.pop %v1530
    %v1532 = vadd.f32 %v1531, 1.0
    %v1533 = vrcp.pop %v1532
    %v1534 = vmul.f32 1.0, %v1533
    %v1535 = vtanh.pop %v1528
    %v1536 = vmul.f32 %v1534, %v1362
    %1538 = vrot.lane.b32.xlu0 %v1535, 64
    %v1539 = vpop.permute.xlu0 %1538
    %v1541 = vmul.f32 %v1534, %v1539
    %1543 = vrot.lane.b32.xlu0 %v1541, 32
    %v1544 = vpop.permute.xlu0 %1543
    %v1546 = vadd.f32 %v1536, %v1544
    %v1547 = vtanh.pop %v1546
    %1549 = vrot.lane.b32.xlu0 %v1547, 64
    %v1550 = vpop.permute.xlu0 %1549
    %v1552 = vmul.f32 %v1534, %v1550
    %v1553 = vpack.c.bf16 %v1552, %v1552
    %1555 = vrot.lane.b32.xlu0 %v1553, 32
    %v1556 = vpop.permute.xlu0 %1555
    %v1558 = vsel %vm238, %v1556, 0
    %1560 = vmatprep.subr.bf16.mxu0 0
    %1561 = vmatpush1.bf16.msra.mxu0 %v234
    %1562 = vmatprep.subr.bf16.mxu0 0
    %1563 = vmatpush1.bf16.msra.mxu0 %v235
    %1564 = vmatprep.subr.bf16.mxu0 0
    %1565 = vmatpush1.bf16.msra.mxu0 0
    %1566 = vmatprep.subr.bf16.mxu0 0
    %1567 = vmatpush1.bf16.msra.mxu0 0
    %1568 = vmatprep.subr.bf16.mxu0 0
    %1569 = vmatpush1.bf16.msra.mxu0 0
    %1570 = vmatprep.subr.bf16.mxu0 0
    %1571 = vmatpush1.bf16.msra.mxu0 0
    %1572 = vmatprep.subr.bf16.mxu0 0
    %1573 = vmatpush1.bf16.msra.mxu0 0
    %1574 = vmatprep.subr.bf16.mxu0 0
    %1575 = vmatpush1.bf16.msra.mxu0 0
    %1576 = vmatprep.subr.bf16.mxu0 0
    %1577 = vmatpush1.bf16.msra.mxu0 0
    %1578 = vmatprep.subr.bf16.mxu0 0
    %1579 = vmatpush1.bf16.msra.mxu0 0
    %1580 = vmatprep.subr.bf16.mxu0 0
    %1581 = vmatpush1.bf16.msra.mxu0 0
    %1582 = vmatprep.subr.bf16.mxu0 0
    %1583 = vmatpush1.bf16.msra.mxu0 0
    %1584 = vmatprep.subr.bf16.mxu0 0
    %1585 = vmatpush1.bf16.msra.mxu0 0
    %1586 = vmatprep.subr.bf16.mxu0 0
    %1587 = vmatpush1.bf16.msra.mxu0 0
    %1588 = vmatprep.subr.bf16.mxu0 0
    %1589 = vmatpush1.bf16.msra.mxu0 0
    %1590 = vmatprep.subr.bf16.mxu0 0
    %1591 = vmatpush1.bf16.msra.mxu0 0
    %1592 = vmatprep.mubr.bf16.mxu0 0
    %1593 = vmatmul.mubr.bf16.gmra.mrb[0].mxu0 %v1558
    %v1594 = vpop.f32.mrb[0].mxu0
    %v1595 = vadd.f32 0.0, %v1594
    %v1596 = vpop.f32.mrb[0].mxu0
    %v1597 = vpop.f32.mrb[0].mxu0
    %v1598 = vpop.f32.mrb[0].mxu0
    %1599 = vdwg.mxu0
    %1600 = vmatprep.subr.bf16.mxu0 0
    %1601 = vmatpush1.bf16.msra.mxu0 %v290
    %1602 = vmatprep.subr.bf16.mxu0 0
    %1603 = vmatpush1.bf16.msra.mxu0 %v291
    %1604 = vmatprep.subr.bf16.mxu0 0
    %1605 = vmatpush1.bf16.msra.mxu0 0
    %1606 = vmatprep.subr.bf16.mxu0 0
    %1607 = vmatpush1.bf16.msra.mxu0 0
    %1608 = vmatprep.subr.bf16.mxu0 0
    %1609 = vmatpush1.bf16.msra.mxu0 0
    %1610 = vmatprep.subr.bf16.mxu0 0
    %1611 = vmatpush1.bf16.msra.mxu0 0
    %1612 = vmatprep.subr.bf16.mxu0 0
    %1613 = vmatpush1.bf16.msra.mxu0 0
    %1614 = vmatprep.subr.bf16.mxu0 0
    %1615 = vmatpush1.bf16.msra.mxu0 0
    %1616 = vmatprep.subr.bf16.mxu0 0
    %1617 = vmatpush1.bf16.msra.mxu0 0
    %1618 = vmatprep.subr.bf16.mxu0 0
    %1619 = vmatpush1.bf16.msra.mxu0 0
    %1620 = vmatprep.subr.bf16.mxu0 0
    %1621 = vmatpush1.bf16.msra.mxu0 0
    %1622 = vmatprep.subr.bf16.mxu0 0
    %1623 = vmatpush1.bf16.msra.mxu0 0
    %1624 = vmatprep.subr.bf16.mxu0 0
    %1625 = vmatpush1.bf16.msra.mxu0 0
    %1626 = vmatprep.subr.bf16.mxu0 0
    %1627 = vmatpush1.bf16.msra.mxu0 0
    %1628 = vmatprep.subr.bf16.mxu0 0
    %1629 = vmatpush1.bf16.msra.mxu0 0
    %1630 = vmatprep.subr.bf16.mxu0 0
    %1631 = vmatpush1.bf16.msra.mxu0 0
    %1632 = vmatprep.mubr.bf16.mxu0 0
    %1633 = vmatmul.mubr.bf16.gmra.mrb[0].mxu0 %v1486
    %v1634 = vpop.f32.mrb[0].mxu0
    %v1635 = vadd.f32 0.0, %v1634
    %v1636 = vpop.f32.mrb[0].mxu0
    %v1637 = vpop.f32.mrb[0].mxu0
    %v1638 = vpop.f32.mrb[0].mxu0
    %1639 = vdwg.mxu0
    %v1640 = vadd.f32 %v210, %v1635
    %v1641 = vxor.u32 %v1640, 2147483648
    %v1642 = vmul.f32 %v1641, 1.442695
    %v1643 = vpow.pop %v1642
    %v1644 = vadd.f32 %v1643, 1.0
    %v1645 = vrcp.pop %v1644
    %v1646 = vmul.f32 1.0, %v1645
    %v1647 = vtanh.pop %v1640
    %v1648 = vmul.f32 %v1646, %v1474
    %1650 = vrot.lane.b32.xlu0 %v1647, 64
    %v1651 = vpop.permute.xlu0 %1650
    %v1653 = vmul.f32 %v1646, %v1651
    %1655 = vrot.lane.b32.xlu0 %v1653, 32
    %v1656 = vpop.permute.xlu0 %1655
    %v1658 = vadd.f32 %v1648, %v1656
    %v1659 = vtanh.pop %v1658
    %1661 = vrot.lane.b32.xlu0 %v1659, 64
    %v1662 = vpop.permute.xlu0 %1661
    %v1664 = vmul.f32 %v1646, %v1662
    %v1665 = vpack.c.bf16 %v1664, %v1664
    %1667 = vrot.lane.b32.xlu0 %v1665, 32
    %v1668 = vpop.permute.xlu0 %1667
    %v1670 = vsel %vm238, %v1668, 0
    %1672 = vmatprep.subr.bf16.mxu0 0
    %1673 = vmatpush1.bf16.msra.mxu0 %v371
    %1674 = vmatprep.subr.bf16.mxu0 0
    %1675 = vmatpush1.bf16.msra.mxu0 %v372
    %1676 = vmatprep.subr.bf16.mxu0 0
    %1677 = vmatpush1.bf16.msra.mxu0 0
    %1678 = vmatprep.subr.bf16.mxu0 0
    %1679 = vmatpush1.bf16.msra.mxu0 0
    %1680 = vmatprep.subr.bf16.mxu0 0
    %1681 = vmatpush1.bf16.msra.mxu0 0
    %1682 = vmatprep.subr.bf16.mxu0 0
    %1683 = vmatpush1.bf16.msra.mxu0 0
    %1684 = vmatprep.subr.bf16.mxu0 0
    %1685 = vmatpush1.bf16.msra.mxu0 0
    %1686 = vmatprep.subr.bf16.mxu0 0
    %1687 = vmatpush1.bf16.msra.mxu0 0
    %1688 = vmatprep.subr.bf16.mxu0 0
    %1689 = vmatpush1.bf16.msra.mxu0 0
    %1690 = vmatprep.subr.bf16.mxu0 0
    %1691 = vmatpush1.bf16.msra.mxu0 0
    %1692 = vmatprep.subr.bf16.mxu0 0
    %1693 = vmatpush1.bf16.msra.mxu0 0
    %1694 = vmatprep.subr.bf16.mxu0 0
    %1695 = vmatpush1.bf16.msra.mxu0 0
    %1696 = vmatprep.subr.bf16.mxu0 0
    %1697 = vmatpush1.bf16.msra.mxu0 0
    %1698 = vmatprep.subr.bf16.mxu0 0
    %1699 = vmatpush1.bf16.msra.mxu0 0
    %1700 = vmatprep.subr.bf16.mxu0 0
    %1701 = vmatpush1.bf16.msra.mxu0 0
    %1702 = vmatprep.subr.bf16.mxu0 0
    %1703 = vmatpush1.bf16.msra.mxu0 0
    %1704 = vmatprep.mubr.bf16.mxu0 0
    %1705 = vmatmul.mubr.bf16.gmra.mrb[0].mxu0 %v1670
    %v1706 = vpop.f32.mrb[0].mxu0
    %v1707 = vadd.f32 %v1595, %v1706
    %v1708 = vpop.f32.mrb[0].mxu0
    %v1709 = vpop.f32.mrb[0].mxu0
    %v1710 = vpop.f32.mrb[0].mxu0
    %1711 = vdwg.mxu0
    %v1712 = vadd.f32 %v1707, %v422
    %v1713 = vxor.u32 %v1712, 2147483648
    %v1714 = vmul.f32 %v1713, 1.442695
    %v1715 = vpow.pop %v1714
    %v1716 = vadd.f32 %v1715, 1.0
    %v1717 = vrcp.pop %v1716
    %v1718 = vmul.f32 1.0, %v1717
    %v1719 = vtanh.pop %v1712
    %v1720 = vmul.f32 %v1718, %v1546
    %1722 = vrot.lane.b32.xlu0 %v1719, 64
    %v1723 = vpop.permute.xlu0 %1722
    %v1725 = vmul.f32 %v1718, %v1723
    %1727 = vrot.lane.b32.xlu0 %v1725, 32
    %v1728 = vpop.permute.xlu0 %1727
    %v1730 = vadd.f32 %v1720, %v1728
    %v1731 = vtanh.pop %v1730
    %1733 = vrot.lane.b32.xlu0 %v1731, 64
    %v1734 = vpop.permute.xlu0 %1733
    %v1736 = vmul.f32 %v1718, %v1734
    %v1737 = vld [vmem:[%s7] sm:$0x1]
    %v1739 = vcombine.high %v1730, %v1730
    %v1741 = vunpack.c.l.s4 1966171168
    %v1742 = vunpack.c.0.s8 %v1741
    %v1743 = vlaneseq
    %v1744 = vshrl.u32 %v1743, 7
    %v1745 = vsub.s32 %v1742, %v1744
    %v1746 = vrot.slane %v1739, %v1745
    %v1747 = vcombine.high %v1746, %v1746
    %v1749 = vunpack.c.l.s4 1966171168
    %v1750 = vunpack.c.0.s8 %v1749
    %v1751 = vlaneseq
    %v1752 = vshrl.u32 %v1751, 7
    %v1753 = vsub.s32 %v1750, %v1752
    %v1754 = vrot.slane %v1747, %v1753
    %v1755 = vcombine.high %v1754, %v1754
    %1756 = vrot.lane.b32.xlu0 %v1755, 96
    %v1757 = vpop.permute.xlu0 %1756
    %v1759 = vmul.f32 %v1737, %v1757
    %v1761 = vlaneseq
    %v1762 = vshrl.u32 %v1761, 7
    %v1763 = vsub.s32 0, %v1762
    %v1764 = vrot.slane %v1759, %v1763
    %1765 = vrot.lane.b32.xlu0 %v1764, 96
    %v1766 = vpop.permute.xlu0 %1765
    %v1768 = vadd.f32 %v1736, %v1766
    %v1769 = vxor.u32 %v1768, 2147483648
    %v1770 = vmul.f32 %v1769, 1.442695
    %v1771 = vpow.pop %v1770
    %v1772 = vadd.f32 %v1771, 1.0
    %v1773 = vrcp.pop %v1772
    %v1774 = vmul.f32 1.0, %v1773
    %v1775 = vld [vmem:[%s8] sm:$0x1]
    %v1776 = vmul.f32 %v1775, %v1757
    %v1778 = vlaneseq
    %v1779 = vshrl.u32 %v1778, 7
    %v1780 = vsub.s32 0, %v1779
    %v1781 = vrot.slane %v1776, %v1780
    %1782 = vrot.lane.b32.xlu0 %v1781, 96
    %v1783 = vpop.permute.xlu0 %1782
    %v1785 = vadd.f32 %v1736, %v1783
    %v1786 = vxor.u32 %v1785, 2147483648
    %v1787 = vmul.f32 %v1786, 1.442695
    %v1788 = vpow.pop %v1787
    %v1789 = vadd.f32 %v1788, 1.0
    %v1790 = vrcp.pop %v1789
    %v1791 = vmul.f32 1.0, %v1790
    %v1792 = vld [vmem:[%s9] sm:$0x1]
    %v1793 = vmul.f32 %v1792, %v1757
    %v1795 = vlaneseq
    %v1796 = vshrl.u32 %v1795, 7
    %v1797 = vsub.s32 0, %v1796
    %v1798 = vrot.slane %v1793, %v1797
    %1799 = vrot.lane.b32.xlu0 %v1798, 96
    %v1800 = vpop.permute.xlu0 %1799
    %v1802 = vadd.f32 %v1736, %v1800
    %v1803 = vxor.u32 %v1802, 2147483648
    %v1804 = vmul.f32 %v1803, 1.442695
    %v1805 = vpow.pop %v1804
    %v1806 = vadd.f32 %v1805, 1.0
    %v1807 = vrcp.pop %v1806
    %v1808 = vmul.f32 1.0, %v1807
    %v1809 = vlaneseq
    %v1810 = vshrl.u32 %v1809, 7
    %v1811 = vsub.s32 7, %v1810
    %v1812 = vrot.slane %v1731, %v1811
    %1814 = vrot.lane.b32.xlu0 %v1812, 64
    %v1815 = vpop.permute.xlu0 %1814
    %v1817 = vmul.f32 %v1791, %v1815
    %v1818 = vlaneseq
    %v1819 = vshrl.u32 %v1818, 7
    %v1820 = vsub.s32 7, %v1819
    %v1821 = vrot.slane %v1730, %v1820
    %1823 = vrot.lane.b32.xlu0 %v1821, 64
    %v1824 = vpop.permute.xlu0 %1823
    %v1826 = vmul.f32 %v1774, %v1824
    %v1827 = vadd.f32 %v1817, %v1826
    %v1828 = vtanh.pop %v1827
    %v1829 = vmul.f32 %v1808, %v1828
    %1831 = vrot.lane.b32.xlu0 %v1829, 32
    %v1832 = vpop.permute.xlu0 %1831
    %1834 = vst.msk [vmem:[#allocation10] sm:$0xff] %vm238, %v1832
    // Predicated region
    $region58: #{tpu_custom_call.1} parent=1 // pred_check
      _
    $region59: #{tpu_custom_call.1} parent=1 // pred_check_branch
      %1836 = sbr.rel (0) target = $region61
    $region60: #{tpu_custom_call.1} parent=1 // pred_region
      %s1838 = ssub.s32 128, 128
      %1839 = vsyncadd [#allocation4], %s1838
      %s1841 = sshll.u32 [#allocation10], 4
      %s1842 = int_to_ptr.vmem [resolvable:$true] %s1841
      %1844 = dma.vmem_to_hbm [thread:$0]  %s1842, 128, %s10, [#allocation4]
    $region61: #{tpu_custom_call.1} parent=1 // pred_fallthru
      _
    // Predicated region
    $region62: #{tpu_custom_call.1} parent=1 // pred_check
      _
    $region63: #{tpu_custom_call.1} parent=1 // pred_check_branch
      %1846 = sbr.rel (0) target = $region65
    $region64: #{tpu_custom_call.1} parent=1 // pred_region
      %1847 = dma.done [#allocation4], 128
    $region65: #{tpu_custom_call.1} parent=1 // pred_fallthru
      _
    %1848 = vsyncpa [#allocation3], 1
    %1849 = vsyncpa [#allocation6], 1
    %1850 = vsyncpa [#allocation9], 1
    %1851 = vsyncpa [#allocation4], 1

</llo_original>
